<compile_context>
chip_gen: v5e
topology: v5e:2x2
jax: 0.10.0
libtpu: 0.0.40
codegen_flags: <defaults>
</compile_context>

<pallas_src>
import math

import jax
import jax.numpy as jnp
from jax.experimental import pallas as pl
from jax.experimental.pallas import tpu as pltpu


# ----------------------------- model config (small) -----------------------------
VOCAB = 50
N_POS = 16
D = 32          # hidden size
H = 4           # heads
HEAD_DIM = D // H
N_LAYER = 2
MLP_DIM = 4 * D
LN_EPS = 1e-5
NEG_INF = -1e9


# ----------------------------------- kernel -------------------------------------
def _ln(x, g, b):
    """LayerNorm over the last axis. x: [M, D], g/b: [1, D]."""
    mu = jnp.mean(x, axis=-1, keepdims=True)
    var = jnp.mean((x - mu) * (x - mu), axis=-1, keepdims=True)
    return (x - mu) * jax.lax.rsqrt(var + LN_EPS) * g + b


def _gpt2_fused_kernel(
    h0_ref, bias_ref,
    ln1_g_ref, ln1_b_ref, attn_w_ref, attn_b_ref,
    attn_proj_w_ref, attn_proj_b_ref,
    ln2_g_ref, ln2_b_ref, fc_w_ref, fc_b_ref,
    mlp_proj_w_ref, mlp_proj_b_ref,
    lnf_g_ref, lnf_b_ref,
    out_ref,
    h_acc, attn_buf,
):
    """One grid step == one transformer block.  Residual stream stays in h_acc."""
    layer = pl.program_id(0)
    BS, Dd = h0_ref.shape
    Bb, Ss, _ = bias_ref.shape
    hd = Dd // H

    # ---- init residual stream from the embeddings on the first layer ----
    @pl.when(layer == 0)
    def _():
        h_acc[...] = h0_ref[...]

    h = h_acc[...]

    # ================= self-attention sub-block =================
    x = _ln(h, ln1_g_ref[...], ln1_b_ref[...])
    qkv = jnp.dot(x, attn_w_ref[...],
                  preferred_element_type=jnp.float32) + attn_b_ref[...]   # [B*S, 3D]

    scale = 1.0 / math.sqrt(hd)
    for b in range(Bb):
        bias_b = bias_ref[b]                               # [S, S] causal + pad
        r0 = b * Ss
        for head in range(H):
            c0 = head * hd
            q_bh = qkv[r0:r0 + Ss, c0:c0 + hd]             # [S, hd]
            k_bh = qkv[r0:r0 + Ss, Dd + c0:Dd + c0 + hd]
            v_bh = qkv[r0:r0 + Ss, 2 * Dd + c0:2 * Dd + c0 + hd]

            scores = jax.lax.dot_general(
                q_bh, k_bh, (((1,), (1,)), ((), ())),
                preferred_element_type=jnp.float32) * scale + bias_b      # [S, S]

            m = jnp.max(scores, axis=-1, keepdims=True)
            p = jnp.exp(scores - m)
            denom = jnp.sum(p, axis=-1, keepdims=True)
            p = p * pl.reciprocal(denom, approx=True)

            attn_buf[r0:r0 + Ss, c0:c0 + hd] = jnp.dot(
                p, v_bh, preferred_element_type=jnp.float32)

    a = jnp.dot(attn_buf[...], attn_proj_w_ref[...],
                preferred_element_type=jnp.float32) + attn_proj_b_ref[...]
    h = h + a

    # ======================= MLP sub-block =======================
    x = _ln(h, ln2_g_ref[...], ln2_b_ref[...])
    m1 = jnp.dot(x, fc_w_ref[...],
                 preferred_element_type=jnp.float32) + fc_b_ref[...]       # [B*S, 4D]
    # GPT-2 "gelu_new" (tanh approximation)
    c = math.sqrt(2.0 / math.pi)
    g = 0.5 * m1 * (1.0 + jnp.tanh(c * (m1 + 0.044715 * m1 * m1 * m1)))
    m2 = jnp.dot(g, mlp_proj_w_ref[...],
                 preferred_element_type=jnp.float32) + mlp_proj_b_ref[...]
    h = h + m2

    h_acc[...] = h

    # ---- final LayerNorm + the single HBM store, fused into the last step ----
    @pl.when(layer == pl.num_programs(0) - 1)
    def _():
        out_ref[...] = _ln(h, lnf_g_ref[...], lnf_b_ref[...])


# -------------------------------- parameter init --------------------------------
def init_params(key):
    def nrm(k, shape, scale=0.02):
        return (scale * jax.random.normal(k, shape)).astype(jnp.float32)

    k_wte, k_wpe, k_attn, k_proj, k_fc, k_mlp = jax.random.split(key, 6)
    params = {
        'wte': nrm(k_wte, (VOCAB, D)),
        'wpe': nrm(k_wpe, (N_POS, D)),
        'lnf_g': jnp.ones((1, D), jnp.float32),
        'lnf_b': jnp.zeros((1, D), jnp.float32),
        # Per-layer weights stacked along a leading layer axis so the Pallas
        # pipeline prefetches layer l+1 while computing layer l.
        'ln1_g': jnp.ones((N_LAYER, 1, D), jnp.float32),
        'ln1_b': jnp.zeros((N_LAYER, 1, D), jnp.float32),
        'attn_w': nrm(k_attn, (N_LAYER, D, 3 * D)),
        'attn_b': jnp.zeros((N_LAYER, 1, 3 * D), jnp.float32),
        'attn_proj_w': nrm(k_proj, (N_LAYER, D, D)),
        'attn_proj_b': jnp.zeros((N_LAYER, 1, D), jnp.float32),
        'ln2_g': jnp.ones((N_LAYER, 1, D), jnp.float32),
        'ln2_b': jnp.zeros((N_LAYER, 1, D), jnp.float32),
        'fc_w': nrm(k_fc, (N_LAYER, D, MLP_DIM)),
        'fc_b': jnp.zeros((N_LAYER, 1, MLP_DIM), jnp.float32),
        'mlp_proj_w': nrm(k_mlp, (N_LAYER, MLP_DIM, D)),
        'mlp_proj_b': jnp.zeros((N_LAYER, 1, D), jnp.float32),
    }
    return params


# ---------------------------------- forward pass --------------------------------
@jax.jit
def gpt2_encoder_forward(params, token_ids, attn_mask):
    """Equivalent of GPT2Encoder.forward on pre-tokenized input.

    token_ids: [B, S] int32,  attn_mask: [B, S] int32 (1 = real token, 0 = pad)
    Returns (cont_reps [B, S, D] float32, token_ids).
    """
    B, S = token_ids.shape

    # embeddings (gather is glue, done in plain JAX)
    h0 = params['wte'][token_ids] + params['wpe'][jnp.arange(S)][None, :, :]
    h0 = h0.astype(jnp.float32).reshape(B * S, D)

    # causal + padding additive bias, hoisted out of the kernel (computed once)
    row = jax.lax.broadcasted_iota(jnp.int32, (S, S), 0)
    col = jax.lax.broadcasted_iota(jnp.int32, (S, S), 1)
    causal = jnp.where(col <= row, 0.0, NEG_INF).astype(jnp.float32)       # [S, S]
    pad = (1.0 - attn_mask.astype(jnp.float32)) * NEG_INF                  # [B, S]
    bias = causal[None, :, :] + pad[:, None, :]                            # [B, S, S]

    per_layer = lambda l: (l, 0, 0)   # noqa: E731
    whole = lambda l: (0, 0)          # noqa: E731

    cont_flat = pl.pallas_call(
        _gpt2_fused_kernel,
        out_shape=jax.ShapeDtypeStruct((B * S, D), jnp.float32),
        grid_spec=pltpu.PrefetchScalarGridSpec(
            num_scalar_prefetch=0,
            grid=(N_LAYER,),
            in_specs=[
                pl.BlockSpec((B * S, D), whole),                       # h0
                pl.BlockSpec((B, S, S), lambda l: (0, 0, 0)),          # bias
                pl.BlockSpec((None, 1, D), per_layer),                 # ln1_g
                pl.BlockSpec((None, 1, D), per_layer),                 # ln1_b
                pl.BlockSpec((None, D, 3 * D), per_layer),             # attn_w
                pl.BlockSpec((None, 1, 3 * D), per_layer),             # attn_b
                pl.BlockSpec((None, D, D), per_layer),                 # attn_proj_w
                pl.BlockSpec((None, 1, D), per_layer),                 # attn_proj_b
                pl.BlockSpec((None, 1, D), per_layer),                 # ln2_g
                pl.BlockSpec((None, 1, D), per_layer),                 # ln2_b
                pl.BlockSpec((None, D, MLP_DIM), per_layer),           # fc_w
                pl.BlockSpec((None, 1, MLP_DIM), per_layer),           # fc_b
                pl.BlockSpec((None, MLP_DIM, D), per_layer),           # mlp_proj_w
                pl.BlockSpec((None, 1, D), per_layer),                 # mlp_proj_b
                pl.BlockSpec((1, D), whole),                           # lnf_g
                pl.BlockSpec((1, D), whole),                           # lnf_b
            ],
            out_specs=pl.BlockSpec((B * S, D), whole),
            scratch_shapes=[
                pltpu.VMEM((B * S, D), jnp.float32),   # residual stream (persists)
                pltpu.VMEM((B * S, D), jnp.float32),   # attention head assembly
            ],
        ),
        compiler_params=pltpu.CompilerParams(
            dimension_semantics=("arbitrary",),
        ),
    )(
        h0, bias,
        params['ln1_g'], params['ln1_b'], params['attn_w'], params['attn_b'],
        params['attn_proj_w'], params['attn_proj_b'],
        params['ln2_g'], params['ln2_b'], params['fc_w'], params['fc_b'],
        params['mlp_proj_w'], params['mlp_proj_b'],
        params['lnf_g'], params['lnf_b'],
    )

    return cont_flat.reshape(B, S, D), token_ids


# -------------------------------------- main -------------------------------------
if __name__ == "__main__":
    key = jax.random.PRNGKey(0)
    k_params, k_tokens = jax.random.split(key)

    params = init_params(k_params)

    # deterministic "tokenized" batch: B=2 sentences, max length S=8, pad id = VOCAB-1
    B, S = 2, 8
    PAD_ID = VOCAB - 1
    lengths = jnp.array([8, 5], dtype=jnp.int32)
    raw_ids = jax.random.randint(k_tokens, (B, S), 0, VOCAB - 1, dtype=jnp.int32)
    pos = jnp.arange(S, dtype=jnp.int32)[None, :]
    attn_mask = (pos < lengths[:, None]).astype(jnp.int32)            # [B, S]
    token_ids = jnp.where(attn_mask == 1, raw_ids, PAD_ID)            # [B, S]

    cont_reps, out_ids = gpt2_encoder_forward(params, token_ids, attn_mask)
    jax.block_until_ready(cont_reps)
    jax.block_until_ready(out_ids)

    assert cont_reps.shape == (B, S, D)
    assert out_ids.shape == (B, S)
    assert bool(jnp.all(jnp.isfinite(cont_reps)))
    print("KERNEL_OK")
</pallas_src>

<mosaic_0001>
module attributes {stable_mosaic.version = 11 : i64} {
  func.func @_gpt2_fused_kernel(%arg0: i32, %arg1: memref<16x32xf32, #tpu.memory_space<vmem>>, %arg2: memref<2x8x8xf32, #tpu.memory_space<vmem>>, %arg3: memref<1x1x32xf32, #tpu.memory_space<vmem>>, %arg4: memref<1x1x32xf32, #tpu.memory_space<vmem>>, %arg5: memref<1x32x96xf32, #tpu.memory_space<vmem>>, %arg6: memref<1x1x96xf32, #tpu.memory_space<vmem>>, %arg7: memref<1x32x32xf32, #tpu.memory_space<vmem>>, %arg8: memref<1x1x32xf32, #tpu.memory_space<vmem>>, %arg9: memref<1x1x32xf32, #tpu.memory_space<vmem>>, %arg10: memref<1x1x32xf32, #tpu.memory_space<vmem>>, %arg11: memref<1x32x128xf32, #tpu.memory_space<vmem>>, %arg12: memref<1x1x128xf32, #tpu.memory_space<vmem>>, %arg13: memref<1x128x32xf32, #tpu.memory_space<vmem>>, %arg14: memref<1x1x32xf32, #tpu.memory_space<vmem>>, %arg15: memref<1x32xf32, #tpu.memory_space<vmem>>, %arg16: memref<1x32xf32, #tpu.memory_space<vmem>>, %arg17: memref<16x32xf32, #tpu.memory_space<vmem>>, %arg18: memref<16x32xf32, #tpu.memory_space<vmem>>, %arg19: memref<16x32xf32, #tpu.memory_space<vmem>>) attributes {dimension_semantics = [#tpu.dimension_semantics<arbitrary>], iteration_bounds = array<i64: 2>, scalar_prefetch = 0 : i64, scratch_operands = 2 : i64, tpu.core_type = #tpu.core_type<tc>, window_params = [{pipeline_mode = #tpu.pipeline_mode<synchronous>, transform_indices = @transform_0, window_bounds = array<i64: 16, 32>}, {pipeline_mode = #tpu.pipeline_mode<synchronous>, transform_indices = @transform_1, window_bounds = array<i64: 2, 8, 8>}, {transform_indices = @transform_2, window_bounds = array<i64: 1, 1, 32>}, {transform_indices = @transform_3, window_bounds = array<i64: 1, 1, 32>}, {transform_indices = @transform_4, window_bounds = array<i64: 1, 32, 96>}, {transform_indices = @transform_5, window_bounds = array<i64: 1, 1, 96>}, {transform_indices = @transform_6, window_bounds = array<i64: 1, 32, 32>}, {transform_indices = @transform_7, window_bounds = array<i64: 1, 1, 32>}, {transform_indices = @transform_8, window_bounds = array<i64: 1, 1, 32>}, {transform_indices = @transform_9, window_bounds = array<i64: 1, 1, 32>}, {transform_indices = @transform_10, window_bounds = array<i64: 1, 32, 128>}, {transform_indices = @transform_11, window_bounds = array<i64: 1, 1, 128>}, {transform_indices = @transform_12, window_bounds = array<i64: 1, 128, 32>}, {transform_indices = @transform_13, window_bounds = array<i64: 1, 1, 32>}, {pipeline_mode = #tpu.pipeline_mode<synchronous>, transform_indices = @transform_14, window_bounds = array<i64: 1, 32>}, {pipeline_mode = #tpu.pipeline_mode<synchronous>, transform_indices = @transform_15, window_bounds = array<i64: 1, 32>}, {pipeline_mode = #tpu.pipeline_mode<synchronous>, transform_indices = @transform_16, window_bounds = array<i64: 16, 32>}]} {
    %c0_i32 = arith.constant 0 : i32
    %0 = arith.cmpi eq, %arg0, %c0_i32 : i32
    %1 = arith.extui %0 : i1 to i32
    %c0_i32_0 = arith.constant 0 : i32
    %2 = arith.cmpi ne, %1, %c0_i32_0 : i32
    scf.if %2 {
      %c0_118 = arith.constant 0 : index
      %c0_119 = arith.constant 0 : index
      %264 = vector.load %arg1[%c0_118, %c0_119] : memref<16x32xf32, #tpu.memory_space<vmem>>, vector<16x32xf32>
      %c0_120 = arith.constant 0 : index
      %c0_121 = arith.constant 0 : index
      %265 = vector.load %arg18[%c0_120, %c0_121] : memref<16x32xf32, #tpu.memory_space<vmem>>, vector<16x32xf32>
      tpu.vector_store %arg18[%c0_120, %c0_121], %264 {strides = array<i32>} : memref<16x32xf32, #tpu.memory_space<vmem>>, vector<16x32xf32>,
    } else {
    }
    %c0 = arith.constant 0 : index
    %c0_1 = arith.constant 0 : index
    %3 = vector.load %arg18[%c0, %c0_1] : memref<16x32xf32, #tpu.memory_space<vmem>>, vector<16x32xf32>
    %c0_2 = arith.constant 0 : index
    %c0_3 = arith.constant 0 : index
    %c0_4 = arith.constant 0 : index
    %4 = vector.load %arg3[%c0_2, %c0_3, %c0_4] : memref<1x1x32xf32, #tpu.memory_space<vmem>>, vector<1x1x32xf32>
    %5 = vector.shape_cast %4 : vector<1x1x32xf32> to vector<1x32xf32>
    %c0_5 = arith.constant 0 : index
    %c0_6 = arith.constant 0 : index
    %c0_7 = arith.constant 0 : index
    %6 = vector.load %arg4[%c0_5, %c0_6, %c0_7] : memref<1x1x32xf32, #tpu.memory_space<vmem>>, vector<1x1x32xf32>
    %7 = vector.shape_cast %6 : vector<1x1x32xf32> to vector<1x32xf32>
    %cst = arith.constant dense<0.000000e+00> : vector<16xf32>
    %8 = vector.multi_reduction <add>, %3, %cst [1] : vector<16x32xf32> to vector<16xf32>
    %9 = vector.shape_cast %8 : vector<16xf32> to vector<16x1xf32>
    %cst_8 = arith.constant 3.200000e+01 : f32
    %10 = vector.broadcast %cst_8 : f32 to vector<16x1xf32>
    %11 = arith.divf %9, %10 : vector<16x1xf32>
    %12 = vector.broadcast %11 : vector<16x1xf32> to vector<16x32xf32>
    %13 = arith.subf %3, %12 : vector<16x32xf32>
    %14 = vector.broadcast %11 : vector<16x1xf32> to vector<16x32xf32>
    %15 = arith.subf %3, %14 : vector<16x32xf32>
    %16 = arith.mulf %13, %15 : vector<16x32xf32>
    %cst_9 = arith.constant dense<0.000000e+00> : vector<16xf32>
    %17 = vector.multi_reduction <add>, %16, %cst_9 [1] : vector<16x32xf32> to vector<16xf32>
    %18 = vector.shape_cast %17 : vector<16xf32> to vector<16x1xf32>
    %cst_10 = arith.constant 3.200000e+01 : f32
    %19 = vector.broadcast %cst_10 : f32 to vector<16x1xf32>
    %20 = arith.divf %18, %19 : vector<16x1xf32>
    %21 = vector.broadcast %11 : vector<16x1xf32> to vector<16x32xf32>
    %22 = arith.subf %3, %21 : vector<16x32xf32>
    %cst_11 = arith.constant 9.99999974E-6 : f32
    %23 = vector.broadcast %cst_11 : f32 to vector<16x1xf32>
    %24 = arith.addf %20, %23 : vector<16x1xf32>
    %25 = math.rsqrt %24 : vector<16x1xf32>
    %26 = vector.broadcast %25 : vector<16x1xf32> to vector<16x32xf32>
    %27 = arith.mulf %22, %26 : vector<16x32xf32>
    %28 = vector.broadcast %5 : vector<1x32xf32> to vector<16x32xf32>
    %29 = arith.mulf %27, %28 : vector<16x32xf32>
    %30 = vector.broadcast %7 : vector<1x32xf32> to vector<16x32xf32>
    %31 = arith.addf %29, %30 : vector<16x32xf32>
    %c0_12 = arith.constant 0 : index
    %c0_13 = arith.constant 0 : index
    %c0_14 = arith.constant 0 : index
    %32 = vector.load %arg5[%c0_12, %c0_13, %c0_14] : memref<1x32x96xf32, #tpu.memory_space<vmem>>, vector<1x32x96xf32>
    %33 = vector.shape_cast %32 : vector<1x32x96xf32> to vector<32x96xf32>
    %cst_15 = arith.constant dense<0.000000e+00> : vector<16x96xf32>
    %34 = tpu.matmul %31, %33, %cst_15 {dimension_numbers = #tpu.dot_dimension_numbers<[1], [0], [0], [1], [0, 0, 1, 1], [], []>} : vector<16x32xf32>, vector<32x96xf32>, vector<16x96xf32> -> vector<16x96xf32>
    %c0_16 = arith.constant 0 : index
    %c0_17 = arith.constant 0 : index
    %c0_18 = arith.constant 0 : index
    %35 = vector.load %arg6[%c0_16, %c0_17, %c0_18] : memref<1x1x96xf32, #tpu.memory_space<vmem>>, vector<1x1x96xf32>
    %36 = vector.shape_cast %35 : vector<1x1x96xf32> to vector<1x96xf32>
    %37 = vector.broadcast %36 : vector<1x96xf32> to vector<16x96xf32>
    %38 = arith.addf %34, %37 : vector<16x96xf32>
    %c0_19 = arith.constant 0 : index
    %c0_20 = arith.constant 0 : index
    %c0_21 = arith.constant 0 : index
    %39 = vector.load %arg2[%c0_19, %c0_20, %c0_21] : memref<2x8x8xf32, #tpu.memory_space<vmem>>, vector<1x8x8xf32>
    %40 = vector.shape_cast %39 : vector<1x8x8xf32> to vector<8x8xf32>
    %41 = vector.extract_strided_slice %38 {offsets = [0, 0], sizes = [8, 8], strides = [1, 1]} : vector<16x96xf32> to vector<8x8xf32>
    %42 = vector.extract_strided_slice %38 {offsets = [0, 32], sizes = [8, 8], strides = [1, 1]} : vector<16x96xf32> to vector<8x8xf32>
    %43 = vector.extract_strided_slice %38 {offsets = [0, 64], sizes = [8, 8], strides = [1, 1]} : vector<16x96xf32> to vector<8x8xf32>
    %cst_22 = arith.constant dense<0.000000e+00> : vector<8x8xf32>
    %44 = tpu.matmul %41, %42, %cst_22 {dimension_numbers = #tpu.dot_dimension_numbers<[1], [1], [0], [0], [0, 0, 1, 0], [], []>} : vector<8x8xf32>, vector<8x8xf32>, vector<8x8xf32> -> vector<8x8xf32>
    %cst_23 = arith.constant 0.353553385 : f32
    %45 = vector.broadcast %cst_23 : f32 to vector<8x8xf32>
    %46 = arith.mulf %44, %45 : vector<8x8xf32>
    %47 = arith.addf %46, %40 : vector<8x8xf32>
    %cst_24 = arith.constant dense<0xFF800000> : vector<8xf32>
    %48 = vector.multi_reduction <maximumf>, %47, %cst_24 [1] : vector<8x8xf32> to vector<8xf32>
    %49 = vector.shape_cast %48 : vector<8xf32> to vector<8x1xf32>
    %50 = vector.broadcast %49 : vector<8x1xf32> to vector<8x8xf32>
    %51 = arith.subf %47, %50 : vector<8x8xf32>
    %52 = math.exp %51 : vector<8x8xf32>
    %cst_25 = arith.constant dense<0.000000e+00> : vector<8xf32>
    %53 = vector.multi_reduction <add>, %52, %cst_25 [1] : vector<8x8xf32> to vector<8xf32>
    %54 = vector.shape_cast %53 : vector<8xf32> to vector<8x1xf32>
    %55 = tpu.reciprocal %54 {approx = true} : vector<8x1xf32> -> vector<8x1xf32>
    %56 = vector.broadcast %55 : vector<8x1xf32> to vector<8x8xf32>
    %57 = arith.mulf %52, %56 : vector<8x8xf32>
    %cst_26 = arith.constant dense<0.000000e+00> : vector<8x8xf32>
    %58 = tpu.matmul %57, %43, %cst_26 {dimension_numbers = #tpu.dot_dimension_numbers<[1], [0], [0], [1], [0, 0, 1, 1], [], []>} : vector<8x8xf32>, vector<8x8xf32>, vector<8x8xf32> -> vector<8x8xf32>
    %c0_27 = arith.constant 0 : index
    %c0_28 = arith.constant 0 : index
    %59 = vector.load %arg19[%c0_27, %c0_28] : memref<16x32xf32, #tpu.memory_space<vmem>>, vector<8x8xf32>
    tpu.vector_store %arg19[%c0_27, %c0_28], %58 {strides = array<i32>} : memref<16x32xf32, #tpu.memory_space<vmem>>, vector<8x8xf32>,
    %60 = vector.extract_strided_slice %38 {offsets = [0, 8], sizes = [8, 8], strides = [1, 1]} : vector<16x96xf32> to vector<8x8xf32>
    %61 = vector.extract_strided_slice %38 {offsets = [0, 40], sizes = [8, 8], strides = [1, 1]} : vector<16x96xf32> to vector<8x8xf32>
    %62 = vector.extract_strided_slice %38 {offsets = [0, 72], sizes = [8, 8], strides = [1, 1]} : vector<16x96xf32> to vector<8x8xf32>
    %cst_29 = arith.constant dense<0.000000e+00> : vector<8x8xf32>
    %63 = tpu.matmul %60, %61, %cst_29 {dimension_numbers = #tpu.dot_dimension_numbers<[1], [1], [0], [0], [0, 0, 1, 0], [], []>} : vector<8x8xf32>, vector<8x8xf32>, vector<8x8xf32> -> vector<8x8xf32>
    %cst_30 = arith.constant 0.353553385 : f32
    %64 = vector.broadcast %cst_30 : f32 to vector<8x8xf32>
    %65 = arith.mulf %63, %64 : vector<8x8xf32>
    %66 = arith.addf %65, %40 : vector<8x8xf32>
    %cst_31 = arith.constant dense<0xFF800000> : vector<8xf32>
    %67 = vector.multi_reduction <maximumf>, %66, %cst_31 [1] : vector<8x8xf32> to vector<8xf32>
    %68 = vector.shape_cast %67 : vector<8xf32> to vector<8x1xf32>
    %69 = vector.broadcast %68 : vector<8x1xf32> to vector<8x8xf32>
    %70 = arith.subf %66, %69 : vector<8x8xf32>
    %71 = math.exp %70 : vector<8x8xf32>
    %cst_32 = arith.constant dense<0.000000e+00> : vector<8xf32>
    %72 = vector.multi_reduction <add>, %71, %cst_32 [1] : vector<8x8xf32> to vector<8xf32>
    %73 = vector.shape_cast %72 : vector<8xf32> to vector<8x1xf32>
    %74 = tpu.reciprocal %73 {approx = true} : vector<8x1xf32> -> vector<8x1xf32>
    %75 = vector.broadcast %74 : vector<8x1xf32> to vector<8x8xf32>
    %76 = arith.mulf %71, %75 : vector<8x8xf32>
    %cst_33 = arith.constant dense<0.000000e+00> : vector<8x8xf32>
    %77 = tpu.matmul %76, %62, %cst_33 {dimension_numbers = #tpu.dot_dimension_numbers<[1], [0], [0], [1], [0, 0, 1, 1], [], []>} : vector<8x8xf32>, vector<8x8xf32>, vector<8x8xf32> -> vector<8x8xf32>
    %c0_34 = arith.constant 0 : index
    %c8 = arith.constant 8 : index
    %78 = vector.load %arg19[%c0_34, %c8] : memref<16x32xf32, #tpu.memory_space<vmem>>, vector<8x8xf32>
    tpu.vector_store %arg19[%c0_34, %c8], %77 {strides = array<i32>} : memref<16x32xf32, #tpu.memory_space<vmem>>, vector<8x8xf32>,
    %79 = vector.extract_strided_slice %38 {offsets = [0, 16], sizes = [8, 8], strides = [1, 1]} : vector<16x96xf32> to vector<8x8xf32>
    %80 = vector.extract_strided_slice %38 {offsets = [0, 48], sizes = [8, 8], strides = [1, 1]} : vector<16x96xf32> to vector<8x8xf32>
    %81 = vector.extract_strided_slice %38 {offsets = [0, 80], sizes = [8, 8], strides = [1, 1]} : vector<16x96xf32> to vector<8x8xf32>
    %cst_35 = arith.constant dense<0.000000e+00> : vector<8x8xf32>
    %82 = tpu.matmul %79, %80, %cst_35 {dimension_numbers = #tpu.dot_dimension_numbers<[1], [1], [0], [0], [0, 0, 1, 0], [], []>} : vector<8x8xf32>, vector<8x8xf32>, vector<8x8xf32> -> vector<8x8xf32>
    %cst_36 = arith.constant 0.353553385 : f32
    %83 = vector.broadcast %cst_36 : f32 to vector<8x8xf32>
    %84 = arith.mulf %82, %83 : vector<8x8xf32>
    %85 = arith.addf %84, %40 : vector<8x8xf32>
    %cst_37 = arith.constant dense<0xFF800000> : vector<8xf32>
    %86 = vector.multi_reduction <maximumf>, %85, %cst_37 [1] : vector<8x8xf32> to vector<8xf32>
    %87 = vector.shape_cast %86 : vector<8xf32> to vector<8x1xf32>
    %88 = vector.broadcast %87 : vector<8x1xf32> to vector<8x8xf32>
    %89 = arith.subf %85, %88 : vector<8x8xf32>
    %90 = math.exp %89 : vector<8x8xf32>
    %cst_38 = arith.constant dense<0.000000e+00> : vector<8xf32>
    %91 = vector.multi_reduction <add>, %90, %cst_38 [1] : vector<8x8xf32> to vector<8xf32>
    %92 = vector.shape_cast %91 : vector<8xf32> to vector<8x1xf32>
    %93 = tpu.reciprocal %92 {approx = true} : vector<8x1xf32> -> vector<8x1xf32>
    %94 = vector.broadcast %93 : vector<8x1xf32> to vector<8x8xf32>
    %95 = arith.mulf %90, %94 : vector<8x8xf32>
    %cst_39 = arith.constant dense<0.000000e+00> : vector<8x8xf32>
    %96 = tpu.matmul %95, %81, %cst_39 {dimension_numbers = #tpu.dot_dimension_numbers<[1], [0], [0], [1], [0, 0, 1, 1], [], []>} : vector<8x8xf32>, vector<8x8xf32>, vector<8x8xf32> -> vector<8x8xf32>
    %c0_40 = arith.constant 0 : index
    %c16 = arith.constant 16 : index
    %97 = vector.load %arg19[%c0_40, %c16] : memref<16x32xf32, #tpu.memory_space<vmem>>, vector<8x8xf32>
    tpu.vector_store %arg19[%c0_40, %c16], %96 {strides = array<i32>} : memref<16x32xf32, #tpu.memory_space<vmem>>, vector<8x8xf32>,
    %98 = vector.extract_strided_slice %38 {offsets = [0, 24], sizes = [8, 8], strides = [1, 1]} : vector<16x96xf32> to vector<8x8xf32>
    %99 = vector.extract_strided_slice %38 {offsets = [0, 56], sizes = [8, 8], strides = [1, 1]} : vector<16x96xf32> to vector<8x8xf32>
    %100 = vector.extract_strided_slice %38 {offsets = [0, 88], sizes = [8, 8], strides = [1, 1]} : vector<16x96xf32> to vector<8x8xf32>
    %cst_41 = arith.constant dense<0.000000e+00> : vector<8x8xf32>
    %101 = tpu.matmul %98, %99, %cst_41 {dimension_numbers = #tpu.dot_dimension_numbers<[1], [1], [0], [0], [0, 0, 1, 0], [], []>} : vector<8x8xf32>, vector<8x8xf32>, vector<8x8xf32> -> vector<8x8xf32>
    %cst_42 = arith.constant 0.353553385 : f32
    %102 = vector.broadcast %cst_42 : f32 to vector<8x8xf32>
    %103 = arith.mulf %101, %102 : vector<8x8xf32>
    %104 = arith.addf %103, %40 : vector<8x8xf32>
    %cst_43 = arith.constant dense<0xFF800000> : vector<8xf32>
    %105 = vector.multi_reduction <maximumf>, %104, %cst_43 [1] : vector<8x8xf32> to vector<8xf32>
    %106 = vector.shape_cast %105 : vector<8xf32> to vector<8x1xf32>
    %107 = vector.broadcast %106 : vector<8x1xf32> to vector<8x8xf32>
    %108 = arith.subf %104, %107 : vector<8x8xf32>
    %109 = math.exp %108 : vector<8x8xf32>
    %cst_44 = arith.constant dense<0.000000e+00> : vector<8xf32>
    %110 = vector.multi_reduction <add>, %109, %cst_44 [1] : vector<8x8xf32> to vector<8xf32>
    %111 = vector.shape_cast %110 : vector<8xf32> to vector<8x1xf32>
    %112 = tpu.reciprocal %111 {approx = true} : vector<8x1xf32> -> vector<8x1xf32>
    %113 = vector.broadcast %112 : vector<8x1xf32> to vector<8x8xf32>
    %114 = arith.mulf %109, %113 : vector<8x8xf32>
    %cst_45 = arith.constant dense<0.000000e+00> : vector<8x8xf32>
    %115 = tpu.matmul %114, %100, %cst_45 {dimension_numbers = #tpu.dot_dimension_numbers<[1], [0], [0], [1], [0, 0, 1, 1], [], []>} : vector<8x8xf32>, vector<8x8xf32>, vector<8x8xf32> -> vector<8x8xf32>
    %c0_46 = arith.constant 0 : index
    %c24 = arith.constant 24 : index
    %116 = vector.load %arg19[%c0_46, %c24] : memref<16x32xf32, #tpu.memory_space<vmem>>, vector<8x8xf32>
    tpu.vector_store %arg19[%c0_46, %c24], %115 {strides = array<i32>} : memref<16x32xf32, #tpu.memory_space<vmem>>, vector<8x8xf32>,
    %c1 = arith.constant 1 : index
    %c0_47 = arith.constant 0 : index
    %c0_48 = arith.constant 0 : index
    %117 = vector.load %arg2[%c1, %c0_47, %c0_48] : memref<2x8x8xf32, #tpu.memory_space<vmem>>, vector<1x8x8xf32>
    %118 = vector.shape_cast %117 : vector<1x8x8xf32> to vector<8x8xf32>
    %119 = vector.extract_strided_slice %38 {offsets = [8, 0], sizes = [8, 8], strides = [1, 1]} : vector<16x96xf32> to vector<8x8xf32>
    %120 = vector.extract_strided_slice %38 {offsets = [8, 32], sizes = [8, 8], strides = [1, 1]} : vector<16x96xf32> to vector<8x8xf32>
    %121 = vector.extract_strided_slice %38 {offsets = [8, 64], sizes = [8, 8], strides = [1, 1]} : vector<16x96xf32> to vector<8x8xf32>
    %cst_49 = arith.constant dense<0.000000e+00> : vector<8x8xf32>
    %122 = tpu.matmul %119, %120, %cst_49 {dimension_numbers = #tpu.dot_dimension_numbers<[1], [1], [0], [0], [0, 0, 1, 0], [], []>} : vector<8x8xf32>, vector<8x8xf32>, vector<8x8xf32> -> vector<8x8xf32>
    %cst_50 = arith.constant 0.353553385 : f32
    %123 = vector.broadcast %cst_50 : f32 to vector<8x8xf32>
    %124 = arith.mulf %122, %123 : vector<8x8xf32>
    %125 = arith.addf %124, %118 : vector<8x8xf32>
    %cst_51 = arith.constant dense<0xFF800000> : vector<8xf32>
    %126 = vector.multi_reduction <maximumf>, %125, %cst_51 [1] : vector<8x8xf32> to vector<8xf32>
    %127 = vector.shape_cast %126 : vector<8xf32> to vector<8x1xf32>
    %128 = vector.broadcast %127 : vector<8x1xf32> to vector<8x8xf32>
    %129 = arith.subf %125, %128 : vector<8x8xf32>
    %130 = math.exp %129 : vector<8x8xf32>
    %cst_52 = arith.constant dense<0.000000e+00> : vector<8xf32>
    %131 = vector.multi_reduction <add>, %130, %cst_52 [1] : vector<8x8xf32> to vector<8xf32>
    %132 = vector.shape_cast %131 : vector<8xf32> to vector<8x1xf32>
    %133 = tpu.reciprocal %132 {approx = true} : vector<8x1xf32> -> vector<8x1xf32>
    %134 = vector.broadcast %133 : vector<8x1xf32> to vector<8x8xf32>
    %135 = arith.mulf %130, %134 : vector<8x8xf32>
    %cst_53 = arith.constant dense<0.000000e+00> : vector<8x8xf32>
    %136 = tpu.matmul %135, %121, %cst_53 {dimension_numbers = #tpu.dot_dimension_numbers<[1], [0], [0], [1], [0, 0, 1, 1], [], []>} : vector<8x8xf32>, vector<8x8xf32>, vector<8x8xf32> -> vector<8x8xf32>
    %c8_54 = arith.constant 8 : index
    %c0_55 = arith.constant 0 : index
    %137 = vector.load %arg19[%c8_54, %c0_55] : memref<16x32xf32, #tpu.memory_space<vmem>>, vector<8x8xf32>
    tpu.vector_store %arg19[%c8_54, %c0_55], %136 {strides = array<i32>} : memref<16x32xf32, #tpu.memory_space<vmem>>, vector<8x8xf32>,
    %138 = vector.extract_strided_slice %38 {offsets = [8, 8], sizes = [8, 8], strides = [1, 1]} : vector<16x96xf32> to vector<8x8xf32>
    %139 = vector.extract_strided_slice %38 {offsets = [8, 40], sizes = [8, 8], strides = [1, 1]} : vector<16x96xf32> to vector<8x8xf32>
    %140 = vector.extract_strided_slice %38 {offsets = [8, 72], sizes = [8, 8], strides = [1, 1]} : vector<16x96xf32> to vector<8x8xf32>
    %cst_56 = arith.constant dense<0.000000e+00> : vector<8x8xf32>
    %141 = tpu.matmul %138, %139, %cst_56 {dimension_numbers = #tpu.dot_dimension_numbers<[1], [1], [0], [0], [0, 0, 1, 0], [], []>} : vector<8x8xf32>, vector<8x8xf32>, vector<8x8xf32> -> vector<8x8xf32>
    %cst_57 = arith.constant 0.353553385 : f32
    %142 = vector.broadcast %cst_57 : f32 to vector<8x8xf32>
    %143 = arith.mulf %141, %142 : vector<8x8xf32>
    %144 = arith.addf %143, %118 : vector<8x8xf32>
    %cst_58 = arith.constant dense<0xFF800000> : vector<8xf32>
    %145 = vector.multi_reduction <maximumf>, %144, %cst_58 [1] : vector<8x8xf32> to vector<8xf32>
    %146 = vector.shape_cast %145 : vector<8xf32> to vector<8x1xf32>
    %147 = vector.broadcast %146 : vector<8x1xf32> to vector<8x8xf32>
    %148 = arith.subf %144, %147 : vector<8x8xf32>
    %149 = math.exp %148 : vector<8x8xf32>
    %cst_59 = arith.constant dense<0.000000e+00> : vector<8xf32>
    %150 = vector.multi_reduction <add>, %149, %cst_59 [1] : vector<8x8xf32> to vector<8xf32>
    %151 = vector.shape_cast %150 : vector<8xf32> to vector<8x1xf32>
    %152 = tpu.reciprocal %151 {approx = true} : vector<8x1xf32> -> vector<8x1xf32>
    %153 = vector.broadcast %152 : vector<8x1xf32> to vector<8x8xf32>
    %154 = arith.mulf %149, %153 : vector<8x8xf32>
    %cst_60 = arith.constant dense<0.000000e+00> : vector<8x8xf32>
    %155 = tpu.matmul %154, %140, %cst_60 {dimension_numbers = #tpu.dot_dimension_numbers<[1], [0], [0], [1], [0, 0, 1, 1], [], []>} : vector<8x8xf32>, vector<8x8xf32>, vector<8x8xf32> -> vector<8x8xf32>
    %c8_61 = arith.constant 8 : index
    %c8_62 = arith.constant 8 : index
    %156 = vector.load %arg19[%c8_61, %c8_62] : memref<16x32xf32, #tpu.memory_space<vmem>>, vector<8x8xf32>
    tpu.vector_store %arg19[%c8_61, %c8_62], %155 {strides = array<i32>} : memref<16x32xf32, #tpu.memory_space<vmem>>, vector<8x8xf32>,
    %157 = vector.extract_strided_slice %38 {offsets = [8, 16], sizes = [8, 8], strides = [1, 1]} : vector<16x96xf32> to vector<8x8xf32>
    %158 = vector.extract_strided_slice %38 {offsets = [8, 48], sizes = [8, 8], strides = [1, 1]} : vector<16x96xf32> to vector<8x8xf32>
    %159 = vector.extract_strided_slice %38 {offsets = [8, 80], sizes = [8, 8], strides = [1, 1]} : vector<16x96xf32> to vector<8x8xf32>
    %cst_63 = arith.constant dense<0.000000e+00> : vector<8x8xf32>
    %160 = tpu.matmul %157, %158, %cst_63 {dimension_numbers = #tpu.dot_dimension_numbers<[1], [1], [0], [0], [0, 0, 1, 0], [], []>} : vector<8x8xf32>, vector<8x8xf32>, vector<8x8xf32> -> vector<8x8xf32>
    %cst_64 = arith.constant 0.353553385 : f32
    %161 = vector.broadcast %cst_64 : f32 to vector<8x8xf32>
    %162 = arith.mulf %160, %161 : vector<8x8xf32>
    %163 = arith.addf %162, %118 : vector<8x8xf32>
    %cst_65 = arith.constant dense<0xFF800000> : vector<8xf32>
    %164 = vector.multi_reduction <maximumf>, %163, %cst_65 [1] : vector<8x8xf32> to vector<8xf32>
    %165 = vector.shape_cast %164 : vector<8xf32> to vector<8x1xf32>
    %166 = vector.broadcast %165 : vector<8x1xf32> to vector<8x8xf32>
    %167 = arith.subf %163, %166 : vector<8x8xf32>
    %168 = math.exp %167 : vector<8x8xf32>
    %cst_66 = arith.constant dense<0.000000e+00> : vector<8xf32>
    %169 = vector.multi_reduction <add>, %168, %cst_66 [1] : vector<8x8xf32> to vector<8xf32>
    %170 = vector.shape_cast %169 : vector<8xf32> to vector<8x1xf32>
    %171 = tpu.reciprocal %170 {approx = true} : vector<8x1xf32> -> vector<8x1xf32>
    %172 = vector.broadcast %171 : vector<8x1xf32> to vector<8x8xf32>
    %173 = arith.mulf %168, %172 : vector<8x8xf32>
    %cst_67 = arith.constant dense<0.000000e+00> : vector<8x8xf32>
    %174 = tpu.matmul %173, %159, %cst_67 {dimension_numbers = #tpu.dot_dimension_numbers<[1], [0], [0], [1], [0, 0, 1, 1], [], []>} : vector<8x8xf32>, vector<8x8xf32>, vector<8x8xf32> -> vector<8x8xf32>
    %c8_68 = arith.constant 8 : index
    %c16_69 = arith.constant 16 : index
    %175 = vector.load %arg19[%c8_68, %c16_69] : memref<16x32xf32, #tpu.memory_space<vmem>>, vector<8x8xf32>
    tpu.vector_store %arg19[%c8_68, %c16_69], %174 {strides = array<i32>} : memref<16x32xf32, #tpu.memory_space<vmem>>, vector<8x8xf32>,
    %176 = vector.extract_strided_slice %38 {offsets = [8, 24], sizes = [8, 8], strides = [1, 1]} : vector<16x96xf32> to vector<8x8xf32>
    %177 = vector.extract_strided_slice %38 {offsets = [8, 56], sizes = [8, 8], strides = [1, 1]} : vector<16x96xf32> to vector<8x8xf32>
    %178 = vector.extract_strided_slice %38 {offsets = [8, 88], sizes = [8, 8], strides = [1, 1]} : vector<16x96xf32> to vector<8x8xf32>
    %cst_70 = arith.constant dense<0.000000e+00> : vector<8x8xf32>
    %179 = tpu.matmul %176, %177, %cst_70 {dimension_numbers = #tpu.dot_dimension_numbers<[1], [1], [0], [0], [0, 0, 1, 0], [], []>} : vector<8x8xf32>, vector<8x8xf32>, vector<8x8xf32> -> vector<8x8xf32>
    %cst_71 = arith.constant 0.353553385 : f32
    %180 = vector.broadcast %cst_71 : f32 to vector<8x8xf32>
    %181 = arith.mulf %179, %180 : vector<8x8xf32>
    %182 = arith.addf %181, %118 : vector<8x8xf32>
    %cst_72 = arith.constant dense<0xFF800000> : vector<8xf32>
    %183 = vector.multi_reduction <maximumf>, %182, %cst_72 [1] : vector<8x8xf32> to vector<8xf32>
    %184 = vector.shape_cast %183 : vector<8xf32> to vector<8x1xf32>
    %185 = vector.broadcast %184 : vector<8x1xf32> to vector<8x8xf32>
    %186 = arith.subf %182, %185 : vector<8x8xf32>
    %187 = math.exp %186 : vector<8x8xf32>
    %cst_73 = arith.constant dense<0.000000e+00> : vector<8xf32>
    %188 = vector.multi_reduction <add>, %187, %cst_73 [1] : vector<8x8xf32> to vector<8xf32>
    %189 = vector.shape_cast %188 : vector<8xf32> to vector<8x1xf32>
    %190 = tpu.reciprocal %189 {approx = true} : vector<8x1xf32> -> vector<8x1xf32>
    %191 = vector.broadcast %190 : vector<8x1xf32> to vector<8x8xf32>
    %192 = arith.mulf %187, %191 : vector<8x8xf32>
    %cst_74 = arith.constant dense<0.000000e+00> : vector<8x8xf32>
    %193 = tpu.matmul %192, %178, %cst_74 {dimension_numbers = #tpu.dot_dimension_numbers<[1], [0], [0], [1], [0, 0, 1, 1], [], []>} : vector<8x8xf32>, vector<8x8xf32>, vector<8x8xf32> -> vector<8x8xf32>
    %c8_75 = arith.constant 8 : index
    %c24_76 = arith.constant 24 : index
    %194 = vector.load %arg19[%c8_75, %c24_76] : memref<16x32xf32, #tpu.memory_space<vmem>>, vector<8x8xf32>
    tpu.vector_store %arg19[%c8_75, %c24_76], %193 {strides = array<i32>} : memref<16x32xf32, #tpu.memory_space<vmem>>, vector<8x8xf32>,
    %c0_77 = arith.constant 0 : index
    %c0_78 = arith.constant 0 : index
    %195 = vector.load %arg19[%c0_77, %c0_78] : memref<16x32xf32, #tpu.memory_space<vmem>>, vector<16x32xf32>
    %c0_79 = arith.constant 0 : index
    %c0_80 = arith.constant 0 : index
    %c0_81 = arith.constant 0 : index
    %196 = vector.load %arg7[%c0_79, %c0_80, %c0_81] : memref<1x32x32xf32, #tpu.memory_space<vmem>>, vector<1x32x32xf32>
    %197 = vector.shape_cast %196 : vector<1x32x32xf32> to vector<32x32xf32>
    %cst_82 = arith.constant dense<0.000000e+00> : vector<16x32xf32>
    %198 = tpu.matmul %195, %197, %cst_82 {dimension_numbers = #tpu.dot_dimension_numbers<[1], [0], [0], [1], [0, 0, 1, 1], [], []>} : vector<16x32xf32>, vector<32x32xf32>, vector<16x32xf32> -> vector<16x32xf32>
    %c0_83 = arith.constant 0 : index
    %c0_84 = arith.constant 0 : index
    %c0_85 = arith.constant 0 : index
    %199 = vector.load %arg8[%c0_83, %c0_84, %c0_85] : memref<1x1x32xf32, #tpu.memory_space<vmem>>, vector<1x1x32xf32>
    %200 = vector.shape_cast %199 : vector<1x1x32xf32> to vector<1x32xf32>
    %201 = vector.broadcast %200 : vector<1x32xf32> to vector<16x32xf32>
    %202 = arith.addf %198, %201 : vector<16x32xf32>
    %203 = arith.addf %3, %202 : vector<16x32xf32>
    %c0_86 = arith.constant 0 : index
    %c0_87 = arith.constant 0 : index
    %c0_88 = arith.constant 0 : index
    %204 = vector.load %arg9[%c0_86, %c0_87, %c0_88] : memref<1x1x32xf32, #tpu.memory_space<vmem>>, vector<1x1x32xf32>
    %205 = vector.shape_cast %204 : vector<1x1x32xf32> to vector<1x32xf32>
    %c0_89 = arith.constant 0 : index
    %c0_90 = arith.constant 0 : index
    %c0_91 = arith.constant 0 : index
    %206 = vector.load %arg10[%c0_89, %c0_90, %c0_91] : memref<1x1x32xf32, #tpu.memory_space<vmem>>, vector<1x1x32xf32>
    %207 = vector.shape_cast %206 : vector<1x1x32xf32> to vector<1x32xf32>
    %cst_92 = arith.constant dense<0.000000e+00> : vector<16xf32>
    %208 = vector.multi_reduction <add>, %203, %cst_92 [1] : vector<16x32xf32> to vector<16xf32>
    %209 = vector.shape_cast %208 : vector<16xf32> to vector<16x1xf32>
    %cst_93 = arith.constant 3.200000e+01 : f32
    %210 = vector.broadcast %cst_93 : f32 to vector<16x1xf32>
    %211 = arith.divf %209, %210 : vector<16x1xf32>
    %212 = vector.broadcast %211 : vector<16x1xf32> to vector<16x32xf32>
    %213 = arith.subf %203, %212 : vector<16x32xf32>
    %214 = vector.broadcast %211 : vector<16x1xf32> to vector<16x32xf32>
    %215 = arith.subf %203, %214 : vector<16x32xf32>
    %216 = arith.mulf %213, %215 : vector<16x32xf32>
    %cst_94 = arith.constant dense<0.000000e+00> : vector<16xf32>
    %217 = vector.multi_reduction <add>, %216, %cst_94 [1] : vector<16x32xf32> to vector<16xf32>
    %218 = vector.shape_cast %217 : vector<16xf32> to vector<16x1xf32>
    %cst_95 = arith.constant 3.200000e+01 : f32
    %219 = vector.broadcast %cst_95 : f32 to vector<16x1xf32>
    %220 = arith.divf %218, %219 : vector<16x1xf32>
    %221 = vector.broadcast %211 : vector<16x1xf32> to vector<16x32xf32>
    %222 = arith.subf %203, %221 : vector<16x32xf32>
    %cst_96 = arith.constant 9.99999974E-6 : f32
    %223 = vector.broadcast %cst_96 : f32 to vector<16x1xf32>
    %224 = arith.addf %220, %223 : vector<16x1xf32>
    %225 = math.rsqrt %224 : vector<16x1xf32>
    %226 = vector.broadcast %225 : vector<16x1xf32> to vector<16x32xf32>
    %227 = arith.mulf %222, %226 : vector<16x32xf32>
    %228 = vector.broadcast %205 : vector<1x32xf32> to vector<16x32xf32>
    %229 = arith.mulf %227, %228 : vector<16x32xf32>
    %230 = vector.broadcast %207 : vector<1x32xf32> to vector<16x32xf32>
    %231 = arith.addf %229, %230 : vector<16x32xf32>
    %c0_97 = arith.constant 0 : index
    %c0_98 = arith.constant 0 : index
    %c0_99 = arith.constant 0 : index
    %232 = vector.load %arg11[%c0_97, %c0_98, %c0_99] : memref<1x32x128xf32, #tpu.memory_space<vmem>>, vector<1x32x128xf32>
    %233 = vector.shape_cast %232 : vector<1x32x128xf32> to vector<32x128xf32>
    %cst_100 = arith.constant dense<0.000000e+00> : vector<16x128xf32>
    %234 = tpu.matmul %231, %233, %cst_100 {dimension_numbers = #tpu.dot_dimension_numbers<[1], [0], [0], [1], [0, 0, 1, 1], [], []>} : vector<16x32xf32>, vector<32x128xf32>, vector<16x128xf32> -> vector<16x128xf32>
    %c0_101 = arith.constant 0 : index
    %c0_102 = arith.constant 0 : index
    %c0_103 = arith.constant 0 : index
    %235 = vector.load %arg12[%c0_101, %c0_102, %c0_103] : memref<1x1x128xf32, #tpu.memory_space<vmem>>, vector<1x1x128xf32>
    %236 = vector.shape_cast %235 : vector<1x1x128xf32> to vector<1x128xf32>
    %237 = vector.broadcast %236 : vector<1x128xf32> to vector<16x128xf32>
    %238 = arith.addf %234, %237 : vector<16x128xf32>
    %cst_104 = arith.constant 5.000000e-01 : f32
    %239 = vector.broadcast %cst_104 : f32 to vector<16x128xf32>
    %240 = arith.mulf %239, %238 : vector<16x128xf32>
    %cst_105 = arith.constant 4.471500e-02 : f32
    %241 = vector.broadcast %cst_105 : f32 to vector<16x128xf32>
    %242 = arith.mulf %241, %238 : vector<16x128xf32>
    %243 = arith.mulf %242, %238 : vector<16x128xf32>
    %244 = arith.mulf %243, %238 : vector<16x128xf32>
    %245 = arith.addf %238, %244 : vector<16x128xf32>
    %cst_106 = arith.constant 0.797884583 : f32
    %246 = vector.broadcast %cst_106 : f32 to vector<16x128xf32>
    %247 = arith.mulf %246, %245 : vector<16x128xf32>
    %248 = math.tanh %247 : vector<16x128xf32>
    %cst_107 = arith.constant 1.000000e+00 : f32
    %249 = vector.broadcast %cst_107 : f32 to vector<16x128xf32>
    %250 = arith.addf %249, %248 : vector<16x128xf32>
    %251 = arith.mulf %240, %250 : vector<16x128xf32>
    %c0_108 = arith.constant 0 : index
    %c0_109 = arith.constant 0 : index
    %c0_110 = arith.constant 0 : index
    %252 = vector.load %arg13[%c0_108, %c0_109, %c0_110] : memref<1x128x32xf32, #tpu.memory_space<vmem>>, vector<1x128x32xf32>
    %253 = vector.shape_cast %252 : vector<1x128x32xf32> to vector<128x32xf32>
    %cst_111 = arith.constant dense<0.000000e+00> : vector<16x32xf32>
    %254 = tpu.matmul %251, %253, %cst_111 {dimension_numbers = #tpu.dot_dimension_numbers<[1], [0], [0], [1], [0, 0, 1, 1], [], []>} : vector<16x128xf32>, vector<128x32xf32>, vector<16x32xf32> -> vector<16x32xf32>
    %c0_112 = arith.constant 0 : index
    %c0_113 = arith.constant 0 : index
    %c0_114 = arith.constant 0 : index
    %255 = vector.load %arg14[%c0_112, %c0_113, %c0_114] : memref<1x1x32xf32, #tpu.memory_space<vmem>>, vector<1x1x32xf32>
    %256 = vector.shape_cast %255 : vector<1x1x32xf32> to vector<1x32xf32>
    %257 = vector.broadcast %256 : vector<1x32xf32> to vector<16x32xf32>
    %258 = arith.addf %254, %257 : vector<16x32xf32>
    %259 = arith.addf %203, %258 : vector<16x32xf32>
    %c0_115 = arith.constant 0 : index
    %c0_116 = arith.constant 0 : index
    %260 = vector.load %arg18[%c0_115, %c0_116] : memref<16x32xf32, #tpu.memory_space<vmem>>, vector<16x32xf32>
    tpu.vector_store %arg18[%c0_115, %c0_116], %259 {strides = array<i32>} : memref<16x32xf32, #tpu.memory_space<vmem>>, vector<16x32xf32>,
    %c1_i32 = arith.constant 1 : i32
    %261 = arith.cmpi eq, %arg0, %c1_i32 : i32
    %262 = arith.extui %261 : i1 to i32
    %c0_i32_117 = arith.constant 0 : i32
    %263 = arith.cmpi ne, %262, %c0_i32_117 : i32
    scf.if %263 {
      %c0_118 = arith.constant 0 : index
      %c0_119 = arith.constant 0 : index
      %264 = vector.load %arg15[%c0_118, %c0_119] : memref<1x32xf32, #tpu.memory_space<vmem>>, vector<1x32xf32>
      %c0_120 = arith.constant 0 : index
      %c0_121 = arith.constant 0 : index
      %265 = vector.load %arg16[%c0_120, %c0_121] : memref<1x32xf32, #tpu.memory_space<vmem>>, vector<1x32xf32>
      %cst_122 = arith.constant dense<0.000000e+00> : vector<16xf32>
      %266 = vector.multi_reduction <add>, %259, %cst_122 [1] : vector<16x32xf32> to vector<16xf32>
      %267 = vector.shape_cast %266 : vector<16xf32> to vector<16x1xf32>
      %cst_123 = arith.constant 3.200000e+01 : f32
      %268 = vector.broadcast %cst_123 : f32 to vector<16x1xf32>
      %269 = arith.divf %267, %268 : vector<16x1xf32>
      %270 = vector.broadcast %269 : vector<16x1xf32> to vector<16x32xf32>
      %271 = arith.subf %259, %270 : vector<16x32xf32>
      %272 = vector.broadcast %269 : vector<16x1xf32> to vector<16x32xf32>
      %273 = arith.subf %259, %272 : vector<16x32xf32>
      %274 = arith.mulf %271, %273 : vector<16x32xf32>
      %cst_124 = arith.constant dense<0.000000e+00> : vector<16xf32>
      %275 = vector.multi_reduction <add>, %274, %cst_124 [1] : vector<16x32xf32> to vector<16xf32>
      %276 = vector.shape_cast %275 : vector<16xf32> to vector<16x1xf32>
      %cst_125 = arith.constant 3.200000e+01 : f32
      %277 = vector.broadcast %cst_125 : f32 to vector<16x1xf32>
      %278 = arith.divf %276, %277 : vector<16x1xf32>
      %279 = vector.broadcast %269 : vector<16x1xf32> to vector<16x32xf32>
      %280 = arith.subf %259, %279 : vector<16x32xf32>
      %cst_126 = arith.constant 9.99999974E-6 : f32
      %281 = vector.broadcast %cst_126 : f32 to vector<16x1xf32>
      %282 = arith.addf %278, %281 : vector<16x1xf32>
      %283 = math.rsqrt %282 : vector<16x1xf32>
      %284 = vector.broadcast %283 : vector<16x1xf32> to vector<16x32xf32>
      %285 = arith.mulf %280, %284 : vector<16x32xf32>
      %286 = vector.broadcast %264 : vector<1x32xf32> to vector<16x32xf32>
      %287 = arith.mulf %285, %286 : vector<16x32xf32>
      %288 = vector.broadcast %265 : vector<1x32xf32> to vector<16x32xf32>
      %289 = arith.addf %287, %288 : vector<16x32xf32>
      %c0_127 = arith.constant 0 : index
      %c0_128 = arith.constant 0 : index
      %290 = vector.load %arg17[%c0_127, %c0_128] : memref<16x32xf32, #tpu.memory_space<vmem>>, vector<16x32xf32>
      tpu.vector_store %arg17[%c0_127, %c0_128], %289 {strides = array<i32>} : memref<16x32xf32, #tpu.memory_space<vmem>>, vector<16x32xf32>,
    } else {
    }
    return
  }
  func.func @transform_0(%arg0: i32) -> (i32, i32) {
    %c0_i32 = arith.constant 0 : i32
    %c0_i32_0 = arith.constant 0 : i32
    %c0_i32_1 = arith.constant 0 : i32
    return %c0_i32, %c0_i32_0 : i32, i32
  }
  func.func @transform_1(%arg0: i32) -> (i32, i32, i32) {
    %c0_i32 = arith.constant 0 : i32
    %c0_i32_0 = arith.constant 0 : i32
    %c0_i32_1 = arith.constant 0 : i32
    %c0_i32_2 = arith.constant 0 : i32
    return %c0_i32, %c0_i32_0, %c0_i32_1 : i32, i32, i32
  }
  func.func @transform_2(%arg0: i32) -> (i32, i32, i32) {
    %c0_i32 = arith.constant 0 : i32
    %c0_i32_0 = arith.constant 0 : i32
    %c0_i32_1 = arith.constant 0 : i32
    return %arg0, %c0_i32, %c0_i32_0 : i32, i32, i32
  }
  func.func @transform_3(%arg0: i32) -> (i32, i32, i32) {
    %c0_i32 = arith.constant 0 : i32
    %c0_i32_0 = arith.constant 0 : i32
    %c0_i32_1 = arith.constant 0 : i32
    return %arg0, %c0_i32, %c0_i32_0 : i32, i32, i32
  }
  func.func @transform_4(%arg0: i32) -> (i32, i32, i32) {
    %c0_i32 = arith.constant 0 : i32
    %c0_i32_0 = arith.constant 0 : i32
    %c0_i32_1 = arith.constant 0 : i32
    return %arg0, %c0_i32, %c0_i32_0 : i32, i32, i32
  }
  func.func @transform_5(%arg0: i32) -> (i32, i32, i32) {
    %c0_i32 = arith.constant 0 : i32
    %c0_i32_0 = arith.constant 0 : i32
    %c0_i32_1 = arith.constant 0 : i32
    return %arg0, %c0_i32, %c0_i32_0 : i32, i32, i32
  }
  func.func @transform_6(%arg0: i32) -> (i32, i32, i32) {
    %c0_i32 = arith.constant 0 : i32
    %c0_i32_0 = arith.constant 0 : i32
    %c0_i32_1 = arith.constant 0 : i32
    return %arg0, %c0_i32, %c0_i32_0 : i32, i32, i32
  }
  func.func @transform_7(%arg0: i32) -> (i32, i32, i32) {
    %c0_i32 = arith.constant 0 : i32
    %c0_i32_0 = arith.constant 0 : i32
    %c0_i32_1 = arith.constant 0 : i32
    return %arg0, %c0_i32, %c0_i32_0 : i32, i32, i32
  }
  func.func @transform_8(%arg0: i32) -> (i32, i32, i32) {
    %c0_i32 = arith.constant 0 : i32
    %c0_i32_0 = arith.constant 0 : i32
    %c0_i32_1 = arith.constant 0 : i32
    return %arg0, %c0_i32, %c0_i32_0 : i32, i32, i32
  }
  func.func @transform_9(%arg0: i32) -> (i32, i32, i32) {
    %c0_i32 = arith.constant 0 : i32
    %c0_i32_0 = arith.constant 0 : i32
    %c0_i32_1 = arith.constant 0 : i32
    return %arg0, %c0_i32, %c0_i32_0 : i32, i32, i32
  }
  func.func @transform_10(%arg0: i32) -> (i32, i32, i32) {
    %c0_i32 = arith.constant 0 : i32
    %c0_i32_0 = arith.constant 0 : i32
    %c0_i32_1 = arith.constant 0 : i32
    return %arg0, %c0_i32, %c0_i32_0 : i32, i32, i32
  }
  func.func @transform_11(%arg0: i32) -> (i32, i32, i32) {
    %c0_i32 = arith.constant 0 : i32
    %c0_i32_0 = arith.constant 0 : i32
    %c0_i32_1 = arith.constant 0 : i32
    return %arg0, %c0_i32, %c0_i32_0 : i32, i32, i32
  }
  func.func @transform_12(%arg0: i32) -> (i32, i32, i32) {
    %c0_i32 = arith.constant 0 : i32
    %c0_i32_0 = arith.constant 0 : i32
    %c0_i32_1 = arith.constant 0 : i32
    return %arg0, %c0_i32, %c0_i32_0 : i32, i32, i32
  }
  func.func @transform_13(%arg0: i32) -> (i32, i32, i32) {
    %c0_i32 = arith.constant 0 : i32
    %c0_i32_0 = arith.constant 0 : i32
    %c0_i32_1 = arith.constant 0 : i32
    return %arg0, %c0_i32, %c0_i32_0 : i32, i32, i32
  }
  func.func @transform_14(%arg0: i32) -> (i32, i32) {
    %c0_i32 = arith.constant 0 : i32
    %c0_i32_0 = arith.constant 0 : i32
    %c0_i32_1 = arith.constant 0 : i32
    return %c0_i32, %c0_i32_0 : i32, i32
  }
  func.func @transform_15(%arg0: i32) -> (i32, i32) {
    %c0_i32 = arith.constant 0 : i32
    %c0_i32_0 = arith.constant 0 : i32
    %c0_i32_1 = arith.constant 0 : i32
    return %c0_i32, %c0_i32_0 : i32, i32
  }
  func.func @transform_16(%arg0: i32) -> (i32, i32) {
    %c0_i32 = arith.constant 0 : i32
    %c0_i32_0 = arith.constant 0 : i32
    %c0_i32_1 = arith.constant 0 : i32
    return %c0_i32, %c0_i32_0 : i32, i32
  }
}

</mosaic_0001>

<llo_original>
// kernel: gpt2_encoder_forward.1
$region0: #{gpt2_encoder_forward.1}
  #allocation0 [shape = 'u32[]', space=smem, size = 0x4, offset = 0x4, fixed_abs, tag = 'smem constant byte address 0x4 - core index']
  #allocation1 [shape = 'u32[72,128]{1,0:T(1,128)}', space=vmem, size = 0x9000, scoped, tag = 'internal scratch']
  #allocation2 [shape = 'f32[16,32]{1,0:T(8,128)}', space=vmem, size = 0x2000, scoped, tag = 'scratch operand']
  #allocation3 [shape = 'f32[16,32]{1,0:T(8,128)}', space=vmem, size = 0x2000, scoped, tag = 'scratch operand']
  %s0 = inlined_call_operand.vmem [shape: f32[16,32], index: 0, kind: input, shape index: {}]
  %s1 = inlined_call_operand.vmem [shape: f32[2,8,8], index: 1, kind: input, shape index: {}]
  %s2 = inlined_call_operand.vmem [shape: f32[2,1,32], index: 2, kind: input, shape index: {}]
  %s3 = inlined_call_operand.vmem [shape: f32[2,1,32], index: 3, kind: input, shape index: {}]
  %s4 = inlined_call_operand.vmem [shape: f32[2,32,96], index: 4, kind: input, shape index: {}]
  %s5 = inlined_call_operand.vmem [shape: f32[2,1,96], index: 5, kind: input, shape index: {}]
  %s6 = inlined_call_operand.vmem [shape: f32[2,32,32], index: 6, kind: input, shape index: {}]
  %s7 = inlined_call_operand.vmem [shape: f32[2,1,32], index: 7, kind: input, shape index: {}]
  %s8 = inlined_call_operand.vmem [shape: f32[2,1,32], index: 8, kind: input, shape index: {}]
  %s9 = inlined_call_operand.vmem [shape: f32[2,1,32], index: 9, kind: input, shape index: {}]
  %s10 = inlined_call_operand.vmem [shape: f32[2,32,128], index: 10, kind: input, shape index: {}]
  %s11 = inlined_call_operand.vmem [shape: f32[2,1,128], index: 11, kind: input, shape index: {}]
  %s12 = inlined_call_operand.vmem [shape: f32[2,128,32], index: 12, kind: input, shape index: {}]
  %s13 = inlined_call_operand.vmem [shape: f32[2,1,32], index: 13, kind: input, shape index: {}]
  %s14 = inlined_call_operand.vmem [shape: f32[1,32], index: 14, kind: input, shape index: {}]
  %s15 = inlined_call_operand.vmem [shape: f32[1,32], index: 15, kind: input, shape index: {}]
  %s16 = inlined_call_operand.hbm [shape: f32[16,32], index: 16, kind: output, shape index: {}]
  %s17 = sld [smem:[#allocation0]]
  $region105: #{gpt2_encoder_forward.1} parent=0
    _
  %s19 = ssub.s32 1, %s17
  %s20 = scalar_select 0, %s19, %s17
  $region1: #{gpt2_encoder_forward.1} parent=0
    #allocation4 [shape = 'u8[8192]{0}', space=vmem, size = 0x2000, scoped, tag = 'output window, operand 0, single buffered']
    #allocation5 [shape = 's32[2]{0}', space=sflag, size = 0x8, scoped, tag = 'scoped memory for gpt2_encoder_forward.1']
    %21 = vsyncpa [#allocation5], 0
    loop: start=0, step=1, limit=4
    $region2: #{gpt2_encoder_forward.1} parent=1 // loop_pre_header
      _
    $region3: #{gpt2_encoder_forward.1} parent=1 // loop_header
      %s23 = sphi 0, %s27
      %p24 = scmp.ge.s32.totalorder %s23, 4
      %s31 = sphi 0, %s31
      %s33 = sphi 0, %s31
      %s34 = sphi 0, %s33
      %s48 = sphi 0, %s34
      %s52 = sphi 0, %s52
      %s54 = sphi 0, %s52
      %s55 = sphi 0, %s54
      %s69 = sphi 0, %s55
      %s75 = sphi 0, %s77
      %s78 = sphi 0, %s75
      %s79 = sphi 0, %s78
      %s95 = sphi 0, %s79
      %s101 = sphi 0, %s103
      %s104 = sphi 0, %s101
      %s105 = sphi 0, %s104
      %s121 = sphi 0, %s105
      %s127 = sphi 0, %s129
      %s130 = sphi 0, %s127
      %s131 = sphi 0, %s130
      %s147 = sphi 0, %s131
      %s153 = sphi 0, %s155
      %s156 = sphi 0, %s153
      %s157 = sphi 0, %s156
      %s173 = sphi 0, %s157
      %s179 = sphi 0, %s181
      %s182 = sphi 0, %s179
      %s183 = sphi 0, %s182
      %s199 = sphi 0, %s183
      %s205 = sphi 0, %s207
      %s208 = sphi 0, %s205
      %s209 = sphi 0, %s208
      %s225 = sphi 0, %s209
      %s231 = sphi 0, %s233
      %s234 = sphi 0, %s231
      %s235 = sphi 0, %s234
      %s251 = sphi 0, %s235
      %s257 = sphi 0, %s259
      %s260 = sphi 0, %s257
      %s261 = sphi 0, %s260
      %s277 = sphi 0, %s261
      %s283 = sphi 0, %s285
      %s286 = sphi 0, %s283
      %s287 = sphi 0, %s286
      %s303 = sphi 0, %s287
      %s309 = sphi 0, %s311
      %s312 = sphi 0, %s309
      %s313 = sphi 0, %s312
      %s329 = sphi 0, %s313
      %s335 = sphi 0, %s337
      %s338 = sphi 0, %s335
      %s339 = sphi 0, %s338
      %s355 = sphi 0, %s339
      %s361 = sphi 0, %s363
      %s364 = sphi 0, %s361
      %s365 = sphi 0, %s364
      %s381 = sphi 0, %s365
      %s385 = sphi 0, %s385
      %s387 = sphi 0, %s385
      %s388 = sphi 0, %s387
      %s402 = sphi 0, %s388
      %s406 = sphi 0, %s406
      %s408 = sphi 0, %s406
      %s409 = sphi 0, %s408
      %s423 = sphi 0, %s409
      %s427 = sphi 0, %s427
      %s429 = sphi 0, %s427
      %s430 = sphi 0, %s429
      %s444 = sphi 0, %s430
    $region4: #{gpt2_encoder_forward.1} parent=1 // loop_header_branch
      %26 = sbr.rel (%p24) target = $region8
    $region5: #{gpt2_encoder_forward.1} parent=1 // loop_body
      %s28 = ssub.s32 %s23, 1
      %s29 = ssub.s32 %s23, 2
      %s30 = sadd.s32 %s23, 1
      %s32 = sadd.s32 %s31, 1
      %p35 = scmp.eq.s32.totalorder %s23, 1
      %p36 = scmp.ne.s32.totalorder %s31, %s33
      %p37 = scmp.eq.s32.totalorder %s23, 0
      %p38 = por %p36, %p37
      %p39 = scmp.ne.s32.totalorder %s31, %s33
      %p40 = scmp.eq.s32.totalorder %s28, 1
      %p41 = por %p39, %p40
      %p42 = scmp.ne.s32.totalorder %s33, %s34
      %p43 = scmp.eq.s32.totalorder %s28, 0
      %p44 = por %p42, %p43
      %p45 = scmp.ne.s32.totalorder %s33, %s34
      %p46 = scmp.eq.s32.totalorder %s29, 1
      %p47 = por %p45, %p46
      %p49 = scmp.ne.s32.totalorder %s34, %s48
      %p50 = scmp.eq.s32.totalorder %s29, 0
      %p51 = por %p49, %p50
      %s53 = sadd.s32 %s52, 1
      %p56 = scmp.eq.s32.totalorder %s23, 1
      %p57 = scmp.ne.s32.totalorder %s52, %s54
      %p58 = scmp.eq.s32.totalorder %s23, 0
      %p59 = por %p57, %p58
      %p60 = scmp.ne.s32.totalorder %s52, %s54
      %p61 = scmp.eq.s32.totalorder %s28, 1
      %p62 = por %p60, %p61
      %p63 = scmp.ne.s32.totalorder %s54, %s55
      %p64 = scmp.eq.s32.totalorder %s28, 0
      %p65 = por %p63, %p64
      %p66 = scmp.ne.s32.totalorder %s54, %s55
      %p67 = scmp.eq.s32.totalorder %s29, 1
      %p68 = por %p66, %p67
      %p70 = scmp.ne.s32.totalorder %s55, %s69
      %p71 = scmp.eq.s32.totalorder %s29, 0
      %p72 = por %p70, %p71
      %s73 = ssub.s32 %s23, %s30
      %p74 = scmp.eq.s32.totalorder %s73, 0
      %s76 = sadd.s32 %s75, 1
      %s77 = scalar_select %p74, %s75, %s76
      %p80 = pneg %p74
      %p81 = scmp.eq.s32.totalorder %s23, 1
      %p82 = por %p80, %p81
      %p83 = scmp.ne.s32.totalorder %s75, %s78
      %p84 = scmp.eq.s32.totalorder %s23, 0
      %p85 = por %p83, %p84
      %p86 = scmp.ne.s32.totalorder %s75, %s78
      %p87 = scmp.eq.s32.totalorder %s28, 1
      %p88 = por %p86, %p87
      %p89 = scmp.ne.s32.totalorder %s78, %s79
      %p90 = scmp.eq.s32.totalorder %s28, 0
      %p91 = por %p89, %p90
      %p92 = scmp.ne.s32.totalorder %s78, %s79
      %p93 = scmp.eq.s32.totalorder %s29, 1
      %p94 = por %p92, %p93
      %p96 = scmp.ne.s32.totalorder %s79, %s95
      %p97 = scmp.eq.s32.totalorder %s29, 0
      %p98 = por %p96, %p97
      %s99 = ssub.s32 %s23, %s30
      %p100 = scmp.eq.s32.totalorder %s99, 0
      %s102 = sadd.s32 %s101, 1
      %s103 = scalar_select %p100, %s101, %s102
      %p106 = pneg %p100
      %p107 = scmp.eq.s32.totalorder %s23, 1
      %p108 = por %p106, %p107
      %p109 = scmp.ne.s32.totalorder %s101, %s104
      %p110 = scmp.eq.s32.totalorder %s23, 0
      %p111 = por %p109, %p110
      %p112 = scmp.ne.s32.totalorder %s101, %s104
      %p113 = scmp.eq.s32.totalorder %s28, 1
      %p114 = por %p112, %p113
      %p115 = scmp.ne.s32.totalorder %s104, %s105
      %p116 = scmp.eq.s32.totalorder %s28, 0
      %p117 = por %p115, %p116
      %p118 = scmp.ne.s32.totalorder %s104, %s105
      %p119 = scmp.eq.s32.totalorder %s29, 1
      %p120 = por %p118, %p119
      %p122 = scmp.ne.s32.totalorder %s105, %s121
      %p123 = scmp.eq.s32.totalorder %s29, 0
      %p124 = por %p122, %p123
      %s125 = ssub.s32 %s23, %s30
      %p126 = scmp.eq.s32.totalorder %s125, 0
      %s128 = sadd.s32 %s127, 1
      %s129 = scalar_select %p126, %s127, %s128
      %p132 = pneg %p126
      %p133 = scmp.eq.s32.totalorder %s23, 1
      %p134 = por %p132, %p133
      %p135 = scmp.ne.s32.totalorder %s127, %s130
      %p136 = scmp.eq.s32.totalorder %s23, 0
      %p137 = por %p135, %p136
      %p138 = scmp.ne.s32.totalorder %s127, %s130
      %p139 = scmp.eq.s32.totalorder %s28, 1
      %p140 = por %p138, %p139
      %p141 = scmp.ne.s32.totalorder %s130, %s131
      %p142 = scmp.eq.s32.totalorder %s28, 0
      %p143 = por %p141, %p142
      %p144 = scmp.ne.s32.totalorder %s130, %s131
      %p145 = scmp.eq.s32.totalorder %s29, 1
      %p146 = por %p144, %p145
      %p148 = scmp.ne.s32.totalorder %s131, %s147
      %p149 = scmp.eq.s32.totalorder %s29, 0
      %p150 = por %p148, %p149
      %s151 = ssub.s32 %s23, %s30
      %p152 = scmp.eq.s32.totalorder %s151, 0
      %s154 = sadd.s32 %s153, 1
      %s155 = scalar_select %p152, %s153, %s154
      %p158 = pneg %p152
      %p159 = scmp.eq.s32.totalorder %s23, 1
      %p160 = por %p158, %p159
      %p161 = scmp.ne.s32.totalorder %s153, %s156
      %p162 = scmp.eq.s32.totalorder %s23, 0
      %p163 = por %p161, %p162
      %p164 = scmp.ne.s32.totalorder %s153, %s156
      %p165 = scmp.eq.s32.totalorder %s28, 1
      %p166 = por %p164, %p165
      %p167 = scmp.ne.s32.totalorder %s156, %s157
      %p168 = scmp.eq.s32.totalorder %s28, 0
      %p169 = por %p167, %p168
      %p170 = scmp.ne.s32.totalorder %s156, %s157
      %p171 = scmp.eq.s32.totalorder %s29, 1
      %p172 = por %p170, %p171
      %p174 = scmp.ne.s32.totalorder %s157, %s173
      %p175 = scmp.eq.s32.totalorder %s29, 0
      %p176 = por %p174, %p175
      %s177 = ssub.s32 %s23, %s30
      %p178 = scmp.eq.s32.totalorder %s177, 0
      %s180 = sadd.s32 %s179, 1
      %s181 = scalar_select %p178, %s179, %s180
      %p184 = pneg %p178
      %p185 = scmp.eq.s32.totalorder %s23, 1
      %p186 = por %p184, %p185
      %p187 = scmp.ne.s32.totalorder %s179, %s182
      %p188 = scmp.eq.s32.totalorder %s23, 0
      %p189 = por %p187, %p188
      %p190 = scmp.ne.s32.totalorder %s179, %s182
      %p191 = scmp.eq.s32.totalorder %s28, 1
      %p192 = por %p190, %p191
      %p193 = scmp.ne.s32.totalorder %s182, %s183
      %p194 = scmp.eq.s32.totalorder %s28, 0
      %p195 = por %p193, %p194
      %p196 = scmp.ne.s32.totalorder %s182, %s183
      %p197 = scmp.eq.s32.totalorder %s29, 1
      %p198 = por %p196, %p197
      %p200 = scmp.ne.s32.totalorder %s183, %s199
      %p201 = scmp.eq.s32.totalorder %s29, 0
      %p202 = por %p200, %p201
      %s203 = ssub.s32 %s23, %s30
      %p204 = scmp.eq.s32.totalorder %s203, 0
      %s206 = sadd.s32 %s205, 1
      %s207 = scalar_select %p204, %s205, %s206
      %p210 = pneg %p204
      %p211 = scmp.eq.s32.totalorder %s23, 1
      %p212 = por %p210, %p211
      %p213 = scmp.ne.s32.totalorder %s205, %s208
      %p214 = scmp.eq.s32.totalorder %s23, 0
      %p215 = por %p213, %p214
      %p216 = scmp.ne.s32.totalorder %s205, %s208
      %p217 = scmp.eq.s32.totalorder %s28, 1
      %p218 = por %p216, %p217
      %p219 = scmp.ne.s32.totalorder %s208, %s209
      %p220 = scmp.eq.s32.totalorder %s28, 0
      %p221 = por %p219, %p220
      %p222 = scmp.ne.s32.totalorder %s208, %s209
      %p223 = scmp.eq.s32.totalorder %s29, 1
      %p224 = por %p222, %p223
      %p226 = scmp.ne.s32.totalorder %s209, %s225
      %p227 = scmp.eq.s32.totalorder %s29, 0
      %p228 = por %p226, %p227
      %s229 = ssub.s32 %s23, %s30
      %p230 = scmp.eq.s32.totalorder %s229, 0
      %s232 = sadd.s32 %s231, 1
      %s233 = scalar_select %p230, %s231, %s232
      %p236 = pneg %p230
      %p237 = scmp.eq.s32.totalorder %s23, 1
      %p238 = por %p236, %p237
      %p239 = scmp.ne.s32.totalorder %s231, %s234
      %p240 = scmp.eq.s32.totalorder %s23, 0
      %p241 = por %p239, %p240
      %p242 = scmp.ne.s32.totalorder %s231, %s234
      %p243 = scmp.eq.s32.totalorder %s28, 1
      %p244 = por %p242, %p243
      %p245 = scmp.ne.s32.totalorder %s234, %s235
      %p246 = scmp.eq.s32.totalorder %s28, 0
      %p247 = por %p245, %p246
      %p248 = scmp.ne.s32.totalorder %s234, %s235
      %p249 = scmp.eq.s32.totalorder %s29, 1
      %p250 = por %p248, %p249
      %p252 = scmp.ne.s32.totalorder %s235, %s251
      %p253 = scmp.eq.s32.totalorder %s29, 0
      %p254 = por %p252, %p253
      %s255 = ssub.s32 %s23, %s30
      %p256 = scmp.eq.s32.totalorder %s255, 0
      %s258 = sadd.s32 %s257, 1
      %s259 = scalar_select %p256, %s257, %s258
      %p262 = pneg %p256
      %p263 = scmp.eq.s32.totalorder %s23, 1
      %p264 = por %p262, %p263
      %p265 = scmp.ne.s32.totalorder %s257, %s260
      %p266 = scmp.eq.s32.totalorder %s23, 0
      %p267 = por %p265, %p266
      %p268 = scmp.ne.s32.totalorder %s257, %s260
      %p269 = scmp.eq.s32.totalorder %s28, 1
      %p270 = por %p268, %p269
      %p271 = scmp.ne.s32.totalorder %s260, %s261
      %p272 = scmp.eq.s32.totalorder %s28, 0
      %p273 = por %p271, %p272
      %p274 = scmp.ne.s32.totalorder %s260, %s261
      %p275 = scmp.eq.s32.totalorder %s29, 1
      %p276 = por %p274, %p275
      %p278 = scmp.ne.s32.totalorder %s261, %s277
      %p279 = scmp.eq.s32.totalorder %s29, 0
      %p280 = por %p278, %p279
      %s281 = ssub.s32 %s23, %s30
      %p282 = scmp.eq.s32.totalorder %s281, 0
      %s284 = sadd.s32 %s283, 1
      %s285 = scalar_select %p282, %s283, %s284
      %p288 = pneg %p282
      %p289 = scmp.eq.s32.totalorder %s23, 1
      %p290 = por %p288, %p289
      %p291 = scmp.ne.s32.totalorder %s283, %s286
      %p292 = scmp.eq.s32.totalorder %s23, 0
      %p293 = por %p291, %p292
      %p294 = scmp.ne.s32.totalorder %s283, %s286
      %p295 = scmp.eq.s32.totalorder %s28, 1
      %p296 = por %p294, %p295
      %p297 = scmp.ne.s32.totalorder %s286, %s287
      %p298 = scmp.eq.s32.totalorder %s28, 0
      %p299 = por %p297, %p298
      %p300 = scmp.ne.s32.totalorder %s286, %s287
      %p301 = scmp.eq.s32.totalorder %s29, 1
      %p302 = por %p300, %p301
      %p304 = scmp.ne.s32.totalorder %s287, %s303
      %p305 = scmp.eq.s32.totalorder %s29, 0
      %p306 = por %p304, %p305
      %s307 = ssub.s32 %s23, %s30
      %p308 = scmp.eq.s32.totalorder %s307, 0
      %s310 = sadd.s32 %s309, 1
      %s311 = scalar_select %p308, %s309, %s310
      %p314 = pneg %p308
      %p315 = scmp.eq.s32.totalorder %s23, 1
      %p316 = por %p314, %p315
      %p317 = scmp.ne.s32.totalorder %s309, %s312
      %p318 = scmp.eq.s32.totalorder %s23, 0
      %p319 = por %p317, %p318
      %p320 = scmp.ne.s32.totalorder %s309, %s312
      %p321 = scmp.eq.s32.totalorder %s28, 1
      %p322 = por %p320, %p321
      %p323 = scmp.ne.s32.totalorder %s312, %s313
      %p324 = scmp.eq.s32.totalorder %s28, 0
      %p325 = por %p323, %p324
      %p326 = scmp.ne.s32.totalorder %s312, %s313
      %p327 = scmp.eq.s32.totalorder %s29, 1
      %p328 = por %p326, %p327
      %p330 = scmp.ne.s32.totalorder %s313, %s329
      %p331 = scmp.eq.s32.totalorder %s29, 0
      %p332 = por %p330, %p331
      %s333 = ssub.s32 %s23, %s30
      %p334 = scmp.eq.s32.totalorder %s333, 0
      %s336 = sadd.s32 %s335, 1
      %s337 = scalar_select %p334, %s335, %s336
      %p340 = pneg %p334
      %p341 = scmp.eq.s32.totalorder %s23, 1
      %p342 = por %p340, %p341
      %p343 = scmp.ne.s32.totalorder %s335, %s338
      %p344 = scmp.eq.s32.totalorder %s23, 0
      %p345 = por %p343, %p344
      %p346 = scmp.ne.s32.totalorder %s335, %s338
      %p347 = scmp.eq.s32.totalorder %s28, 1
      %p348 = por %p346, %p347
      %p349 = scmp.ne.s32.totalorder %s338, %s339
      %p350 = scmp.eq.s32.totalorder %s28, 0
      %p351 = por %p349, %p350
      %p352 = scmp.ne.s32.totalorder %s338, %s339
      %p353 = scmp.eq.s32.totalorder %s29, 1
      %p354 = por %p352, %p353
      %p356 = scmp.ne.s32.totalorder %s339, %s355
      %p357 = scmp.eq.s32.totalorder %s29, 0
      %p358 = por %p356, %p357
      %s359 = ssub.s32 %s23, %s30
      %p360 = scmp.eq.s32.totalorder %s359, 0
      %s362 = sadd.s32 %s361, 1
      %s363 = scalar_select %p360, %s361, %s362
      %p366 = pneg %p360
      %p367 = scmp.eq.s32.totalorder %s23, 1
      %p368 = por %p366, %p367
      %p369 = scmp.ne.s32.totalorder %s361, %s364
      %p370 = scmp.eq.s32.totalorder %s23, 0
      %p371 = por %p369, %p370
      %p372 = scmp.ne.s32.totalorder %s361, %s364
      %p373 = scmp.eq.s32.totalorder %s28, 1
      %p374 = por %p372, %p373
      %p375 = scmp.ne.s32.totalorder %s364, %s365
      %p376 = scmp.eq.s32.totalorder %s28, 0
      %p377 = por %p375, %p376
      %p378 = scmp.ne.s32.totalorder %s364, %s365
      %p379 = scmp.eq.s32.totalorder %s29, 1
      %p380 = por %p378, %p379
      %p382 = scmp.ne.s32.totalorder %s365, %s381
      %p383 = scmp.eq.s32.totalorder %s29, 0
      %p384 = por %p382, %p383
      %s386 = sadd.s32 %s385, 1
      %p389 = scmp.eq.s32.totalorder %s23, 1
      %p390 = scmp.ne.s32.totalorder %s385, %s387
      %p391 = scmp.eq.s32.totalorder %s23, 0
      %p392 = por %p390, %p391
      %p393 = scmp.ne.s32.totalorder %s385, %s387
      %p394 = scmp.eq.s32.totalorder %s28, 1
      %p395 = por %p393, %p394
      %p396 = scmp.ne.s32.totalorder %s387, %s388
      %p397 = scmp.eq.s32.totalorder %s28, 0
      %p398 = por %p396, %p397
      %p399 = scmp.ne.s32.totalorder %s387, %s388
      %p400 = scmp.eq.s32.totalorder %s29, 1
      %p401 = por %p399, %p400
      %p403 = scmp.ne.s32.totalorder %s388, %s402
      %p404 = scmp.eq.s32.totalorder %s29, 0
      %p405 = por %p403, %p404
      %s407 = sadd.s32 %s406, 1
      %p410 = scmp.eq.s32.totalorder %s23, 1
      %p411 = scmp.ne.s32.totalorder %s406, %s408
      %p412 = scmp.eq.s32.totalorder %s23, 0
      %p413 = por %p411, %p412
      %p414 = scmp.ne.s32.totalorder %s406, %s408
      %p415 = scmp.eq.s32.totalorder %s28, 1
      %p416 = por %p414, %p415
      %p417 = scmp.ne.s32.totalorder %s408, %s409
      %p418 = scmp.eq.s32.totalorder %s28, 0
      %p419 = por %p417, %p418
      %p420 = scmp.ne.s32.totalorder %s408, %s409
      %p421 = scmp.eq.s32.totalorder %s29, 1
      %p422 = por %p420, %p421
      %p424 = scmp.ne.s32.totalorder %s409, %s423
      %p425 = scmp.eq.s32.totalorder %s29, 0
      %p426 = por %p424, %p425
      %s428 = sadd.s32 %s427, 1
      %p431 = scmp.eq.s32.totalorder %s23, 1
      %p432 = scmp.ne.s32.totalorder %s427, %s429
      %p433 = scmp.eq.s32.totalorder %s23, 0
      %p434 = por %p432, %p433
      %p435 = scmp.ne.s32.totalorder %s427, %s429
      %p436 = scmp.eq.s32.totalorder %s28, 1
      %p437 = por %p435, %p436
      %p438 = scmp.ne.s32.totalorder %s429, %s430
      %p439 = scmp.eq.s32.totalorder %s28, 0
      %p440 = por %p438, %p439
      %p441 = scmp.ne.s32.totalorder %s429, %s430
      %p442 = scmp.eq.s32.totalorder %s29, 1
      %p443 = por %p441, %p442
      %p445 = scmp.ne.s32.totalorder %s430, %s444
      %p446 = scmp.eq.s32.totalorder %s29, 0
      %p447 = por %p445, %p446
      %p448 = scmp.le.s32.totalorder 1, %s23
      %p449 = scmp.lt.s32.totalorder %s23, 3
      %p450 = pnand %p448, %p449
      %p451 = pneg %p450
      // Predicated region
      $region9: #{gpt2_encoder_forward.1} parent=5 // pred_check
        _
      $region10: #{gpt2_encoder_forward.1} parent=5 // pred_check_branch
        %453 = sbr.rel (%p450) target = $region12
      $region11: #{gpt2_encoder_forward.1} parent=5 // pred_region
        %s454 = ssub.s32 %s23, 1
        // Predicated region
        $region13: #{gpt2_encoder_forward.1} parent=11 // pred_check
          %p455 = pneg %p44
        $region14: #{gpt2_encoder_forward.1} parent=11 // pred_check_branch
          %457 = sbr.rel (%p455) target = $region16
        $region15: #{gpt2_encoder_forward.1} parent=11 // pred_region
          _
        $region16: #{gpt2_encoder_forward.1} parent=11 // pred_fallthru
          _
        // Predicated region
        $region17: #{gpt2_encoder_forward.1} parent=11 // pred_check
          %p458 = pneg %p65
        $region18: #{gpt2_encoder_forward.1} parent=11 // pred_check_branch
          %460 = sbr.rel (%p458) target = $region20
        $region19: #{gpt2_encoder_forward.1} parent=11 // pred_region
          _
        $region20: #{gpt2_encoder_forward.1} parent=11 // pred_fallthru
          _
        // Predicated region
        $region21: #{gpt2_encoder_forward.1} parent=11 // pred_check
          %p461 = pneg %p398
        $region22: #{gpt2_encoder_forward.1} parent=11 // pred_check_branch
          %463 = sbr.rel (%p461) target = $region24
        $region23: #{gpt2_encoder_forward.1} parent=11 // pred_region
          _
        $region24: #{gpt2_encoder_forward.1} parent=11 // pred_fallthru
          _
        // Predicated region
        $region25: #{gpt2_encoder_forward.1} parent=11 // pred_check
          %p464 = pneg %p419
        $region26: #{gpt2_encoder_forward.1} parent=11 // pred_check_branch
          %466 = sbr.rel (%p464) target = $region28
        $region27: #{gpt2_encoder_forward.1} parent=11 // pred_region
          _
        $region28: #{gpt2_encoder_forward.1} parent=11 // pred_fallthru
          _
      $region12: #{gpt2_encoder_forward.1} parent=5 // pred_fallthru
        _
      %p467 = scmp.lt.s32.totalorder %s23, 2
      // Predicated region
      $region29: #{gpt2_encoder_forward.1} parent=5 // pred_check
        %p468 = pneg %p467
      $region30: #{gpt2_encoder_forward.1} parent=5 // pred_check_branch
        %470 = sbr.rel (%p468) target = $region32
      $region31: #{gpt2_encoder_forward.1} parent=5 // pred_region
        // Predicated region
        $region33: #{gpt2_encoder_forward.1} parent=31 // pred_check
          %p471 = pneg %p85
        $region34: #{gpt2_encoder_forward.1} parent=31 // pred_check_branch
          %473 = sbr.rel (%p471) target = $region36
        $region35: #{gpt2_encoder_forward.1} parent=31 // pred_region
          %p474 = scmp.lt.s32.totalorder %s23, 1
          %s475 = scalar_select %p474, %s23, 1
          %s476 = scalar_lea.vmem %s2, %s475
        $region36: #{gpt2_encoder_forward.1} parent=31 // pred_fallthru
          _
        // Predicated region
        $region37: #{gpt2_encoder_forward.1} parent=31 // pred_check
          %p477 = pneg %p111
        $region38: #{gpt2_encoder_forward.1} parent=31 // pred_check_branch
          %479 = sbr.rel (%p477) target = $region40
        $region39: #{gpt2_encoder_forward.1} parent=31 // pred_region
          %p480 = scmp.lt.s32.totalorder %s23, 1
          %s481 = scalar_select %p480, %s23, 1
          %s482 = scalar_lea.vmem %s3, %s481
        $region40: #{gpt2_encoder_forward.1} parent=31 // pred_fallthru
          _
        // Predicated region
        $region41: #{gpt2_encoder_forward.1} parent=31 // pred_check
          %p483 = pneg %p137
        $region42: #{gpt2_encoder_forward.1} parent=31 // pred_check_branch
          %485 = sbr.rel (%p483) target = $region44
        $region43: #{gpt2_encoder_forward.1} parent=31 // pred_region
          %p486 = scmp.lt.s32.totalorder %s23, 1
          %s487 = scalar_select %p486, %s23, 1
          %s488 = smul.addr %s487, 4
          %s489 = smul.addr %s488, 8
          %s490 = scalar_lea.vmem %s4, %s489
        $region44: #{gpt2_encoder_forward.1} parent=31 // pred_fallthru
          _
        // Predicated region
        $region45: #{gpt2_encoder_forward.1} parent=31 // pred_check
          %p491 = pneg %p163
        $region46: #{gpt2_encoder_forward.1} parent=31 // pred_check_branch
          %493 = sbr.rel (%p491) target = $region48
        $region47: #{gpt2_encoder_forward.1} parent=31 // pred_region
          %p494 = scmp.lt.s32.totalorder %s23, 1
          %s495 = scalar_select %p494, %s23, 1
          %s496 = scalar_lea.vmem %s5, %s495
        $region48: #{gpt2_encoder_forward.1} parent=31 // pred_fallthru
          _
        // Predicated region
        $region49: #{gpt2_encoder_forward.1} parent=31 // pred_check
          %p497 = pneg %p189
        $region50: #{gpt2_encoder_forward.1} parent=31 // pred_check_branch
          %499 = sbr.rel (%p497) target = $region52
        $region51: #{gpt2_encoder_forward.1} parent=31 // pred_region
          %p500 = scmp.lt.s32.totalorder %s23, 1
          %s501 = scalar_select %p500, %s23, 1
          %s502 = smul.addr %s501, 4
          %s503 = smul.addr %s502, 8
          %s504 = scalar_lea.vmem %s6, %s503
        $region52: #{gpt2_encoder_forward.1} parent=31 // pred_fallthru
          _
        // Predicated region
        $region53: #{gpt2_encoder_forward.1} parent=31 // pred_check
          %p505 = pneg %p215
        $region54: #{gpt2_encoder_forward.1} parent=31 // pred_check_branch
          %507 = sbr.rel (%p505) target = $region56
        $region55: #{gpt2_encoder_forward.1} parent=31 // pred_region
          %p508 = scmp.lt.s32.totalorder %s23, 1
          %s509 = scalar_select %p508, %s23, 1
          %s510 = scalar_lea.vmem %s7, %s509
        $region56: #{gpt2_encoder_forward.1} parent=31 // pred_fallthru
          _
        // Predicated region
        $region57: #{gpt2_encoder_forward.1} parent=31 // pred_check
          %p511 = pneg %p241
        $region58: #{gpt2_encoder_forward.1} parent=31 // pred_check_branch
          %513 = sbr.rel (%p511) target = $region60
        $region59: #{gpt2_encoder_forward.1} parent=31 // pred_region
          %p514 = scmp.lt.s32.totalorder %s23, 1
          %s515 = scalar_select %p514, %s23, 1
          %s516 = scalar_lea.vmem %s8, %s515
        $region60: #{gpt2_encoder_forward.1} parent=31 // pred_fallthru
          _
        // Predicated region
        $region61: #{gpt2_encoder_forward.1} parent=31 // pred_check
          %p517 = pneg %p267
        $region62: #{gpt2_encoder_forward.1} parent=31 // pred_check_branch
          %519 = sbr.rel (%p517) target = $region64
        $region63: #{gpt2_encoder_forward.1} parent=31 // pred_region
          %p520 = scmp.lt.s32.totalorder %s23, 1
          %s521 = scalar_select %p520, %s23, 1
          %s522 = scalar_lea.vmem %s9, %s521
        $region64: #{gpt2_encoder_forward.1} parent=31 // pred_fallthru
          _
        // Predicated region
        $region65: #{gpt2_encoder_forward.1} parent=31 // pred_check
          %p523 = pneg %p293
        $region66: #{gpt2_encoder_forward.1} parent=31 // pred_check_branch
          %525 = sbr.rel (%p523) target = $region68
        $region67: #{gpt2_encoder_forward.1} parent=31 // pred_region
          %p526 = scmp.lt.s32.totalorder %s23, 1
          %s527 = scalar_select %p526, %s23, 1
          %s528 = smul.addr %s527, 4
          %s529 = smul.addr %s528, 8
          %s530 = scalar_lea.vmem %s10, %s529
        $region68: #{gpt2_encoder_forward.1} parent=31 // pred_fallthru
          _
        // Predicated region
        $region69: #{gpt2_encoder_forward.1} parent=31 // pred_check
          %p531 = pneg %p319
        $region70: #{gpt2_encoder_forward.1} parent=31 // pred_check_branch
          %533 = sbr.rel (%p531) target = $region72
        $region71: #{gpt2_encoder_forward.1} parent=31 // pred_region
          %p534 = scmp.lt.s32.totalorder %s23, 1
          %s535 = scalar_select %p534, %s23, 1
          %s536 = scalar_lea.vmem %s11, %s535
        $region72: #{gpt2_encoder_forward.1} parent=31 // pred_fallthru
          _
        // Predicated region
        $region73: #{gpt2_encoder_forward.1} parent=31 // pred_check
          %p537 = pneg %p345
        $region74: #{gpt2_encoder_forward.1} parent=31 // pred_check_branch
          %539 = sbr.rel (%p537) target = $region76
        $region75: #{gpt2_encoder_forward.1} parent=31 // pred_region
          %p540 = scmp.lt.s32.totalorder %s23, 1
          %s541 = scalar_select %p540, %s23, 1
          %s542 = smul.addr %s541, 16
          %s543 = smul.addr %s542, 8
          %s544 = scalar_lea.vmem %s12, %s543
        $region76: #{gpt2_encoder_forward.1} parent=31 // pred_fallthru
          _
        // Predicated region
        $region77: #{gpt2_encoder_forward.1} parent=31 // pred_check
          %p545 = pneg %p371
        $region78: #{gpt2_encoder_forward.1} parent=31 // pred_check_branch
          %547 = sbr.rel (%p545) target = $region80
        $region79: #{gpt2_encoder_forward.1} parent=31 // pred_region
          %p548 = scmp.lt.s32.totalorder %s23, 1
          %s549 = scalar_select %p548, %s23, 1
          %s550 = scalar_lea.vmem %s13, %s549
        $region80: #{gpt2_encoder_forward.1} parent=31 // pred_fallthru
          _
      $region32: #{gpt2_encoder_forward.1} parent=5 // pred_fallthru
        _
      %p551 = scmp.le.s32.totalorder 1, %s23
      %p552 = scmp.lt.s32.totalorder %s23, 3
      %p553 = pnand %p551, %p552
      %p554 = pneg %p553
      // Predicated region
      $region81: #{gpt2_encoder_forward.1} parent=5 // pred_check
        _
      $region82: #{gpt2_encoder_forward.1} parent=5 // pred_check_branch
        %556 = sbr.rel (%p553) target = $region84
      $region83: #{gpt2_encoder_forward.1} parent=5 // pred_region
        %s557 = ssub.s32 %s23, 1
        %p558 = pneg %p44
        %p559 = pneg %p41
        %p560 = pneg %p65
        %p561 = pneg %p62
        %p562 = scmp.lt.s32.totalorder %s28, 1
        %s563 = scalar_select %p562, %s28, 1
        %s564 = scalar_lea.vmem %s2, %s563
        %p565 = pneg %p91
        %p566 = pneg %p88
        %p567 = scmp.lt.s32.totalorder %s28, 1
        %s568 = scalar_select %p567, %s28, 1
        %s569 = scalar_lea.vmem %s3, %s568
        %p570 = pneg %p117
        %p571 = pneg %p114
        %p572 = scmp.lt.s32.totalorder %s28, 1
        %s573 = scalar_select %p572, %s28, 1
        %s574 = smul.addr %s573, 4
        %s575 = smul.addr %s574, 8
        %s576 = scalar_lea.vmem %s4, %s575
        %p577 = pneg %p143
        %p578 = pneg %p140
        %p579 = scmp.lt.s32.totalorder %s28, 1
        %s580 = scalar_select %p579, %s28, 1
        %s581 = scalar_lea.vmem %s5, %s580
        %p582 = pneg %p169
        %p583 = pneg %p166
        %p584 = scmp.lt.s32.totalorder %s28, 1
        %s585 = scalar_select %p584, %s28, 1
        %s586 = smul.addr %s585, 4
        %s587 = smul.addr %s586, 8
        %s588 = scalar_lea.vmem %s6, %s587
        %p589 = pneg %p195
        %p590 = pneg %p192
        %p591 = scmp.lt.s32.totalorder %s28, 1
        %s592 = scalar_select %p591, %s28, 1
        %s593 = scalar_lea.vmem %s7, %s592
        %p594 = pneg %p221
        %p595 = pneg %p218
        %p596 = scmp.lt.s32.totalorder %s28, 1
        %s597 = scalar_select %p596, %s28, 1
        %s598 = scalar_lea.vmem %s8, %s597
        %p599 = pneg %p247
        %p600 = pneg %p244
        %p601 = scmp.lt.s32.totalorder %s28, 1
        %s602 = scalar_select %p601, %s28, 1
        %s603 = scalar_lea.vmem %s9, %s602
        %p604 = pneg %p273
        %p605 = pneg %p270
        %p606 = scmp.lt.s32.totalorder %s28, 1
        %s607 = scalar_select %p606, %s28, 1
        %s608 = smul.addr %s607, 4
        %s609 = smul.addr %s608, 8
        %s610 = scalar_lea.vmem %s10, %s609
        %p611 = pneg %p299
        %p612 = pneg %p296
        %p613 = scmp.lt.s32.totalorder %s28, 1
        %s614 = scalar_select %p613, %s28, 1
        %s615 = scalar_lea.vmem %s11, %s614
        %p616 = pneg %p325
        %p617 = pneg %p322
        %p618 = scmp.lt.s32.totalorder %s28, 1
        %s619 = scalar_select %p618, %s28, 1
        %s620 = smul.addr %s619, 16
        %s621 = smul.addr %s620, 8
        %s622 = scalar_lea.vmem %s12, %s621
        %p623 = pneg %p351
        %p624 = pneg %p348
        %p625 = scmp.lt.s32.totalorder %s28, 1
        %s626 = scalar_select %p625, %s28, 1
        %s627 = scalar_lea.vmem %s13, %s626
        %p628 = pneg %p377
        %p629 = pneg %p374
        %p630 = pneg %p398
        %p631 = pneg %p395
        %p632 = pneg %p419
        %p633 = pneg %p416
        %p634 = pneg %p440
        %p635 = pneg %p437
        %p636 = scmp.lt.s32.totalorder %s28, 1
        %s637 = scalar_select %p636, %s28, 1
        %s638 = scalar_lea.vmem %s2, %s637
        %p639 = scmp.lt.s32.totalorder %s28, 1
        %s640 = scalar_select %p639, %s28, 1
        %s641 = scalar_lea.vmem %s3, %s640
        %p642 = scmp.lt.s32.totalorder %s28, 1
        %s643 = scalar_select %p642, %s28, 1
        %s644 = smul.addr %s643, 4
        %s645 = smul.addr %s644, 8
        %s646 = scalar_lea.vmem %s4, %s645
        %p647 = scmp.lt.s32.totalorder %s28, 1
        %s648 = scalar_select %p647, %s28, 1
        %s649 = scalar_lea.vmem %s5, %s648
        %p650 = scmp.lt.s32.totalorder %s28, 1
        %s651 = scalar_select %p650, %s28, 1
        %s652 = smul.addr %s651, 4
        %s653 = smul.addr %s652, 8
        %s654 = scalar_lea.vmem %s6, %s653
        %p655 = scmp.lt.s32.totalorder %s28, 1
        %s656 = scalar_select %p655, %s28, 1
        %s657 = scalar_lea.vmem %s7, %s656
        %p658 = scmp.lt.s32.totalorder %s28, 1
        %s659 = scalar_select %p658, %s28, 1
        %s660 = scalar_lea.vmem %s8, %s659
        %p661 = scmp.lt.s32.totalorder %s28, 1
        %s662 = scalar_select %p661, %s28, 1
        %s663 = scalar_lea.vmem %s9, %s662
        %p664 = scmp.lt.s32.totalorder %s28, 1
        %s665 = scalar_select %p664, %s28, 1
        %s666 = smul.addr %s665, 4
        %s667 = smul.addr %s666, 8
        %s668 = scalar_lea.vmem %s10, %s667
        %p669 = scmp.lt.s32.totalorder %s28, 1
        %s670 = scalar_select %p669, %s28, 1
        %s671 = scalar_lea.vmem %s11, %s670
        %p672 = scmp.lt.s32.totalorder %s28, 1
        %s673 = scalar_select %p672, %s28, 1
        %s674 = smul.addr %s673, 16
        %s675 = smul.addr %s674, 8
        %s676 = scalar_lea.vmem %s12, %s675
        %p677 = scmp.lt.s32.totalorder %s28, 1
        %s678 = scalar_select %p677, %s28, 1
        %s679 = scalar_lea.vmem %s13, %s678
        %p680 = scmp.eq.s32.totalorder %s28, 0
        // Predicated region
        $region85: #{gpt2_encoder_forward.1} parent=83 // pred_check
          %p681 = pneg %p680
        $region86: #{gpt2_encoder_forward.1} parent=83 // pred_check_branch
          %683 = sbr.rel (%p681) target = $region88
        $region87: #{gpt2_encoder_forward.1} parent=83 // pred_region
          %v684 = vld [vmem:[%s0] sm:$0xff]
          %v685 = vld [vmem:[%s0 + $0x8] sm:$0xff]
          %vm686 = vcmask 261120
          %687 = vst.msk [vmem:[#allocation2] sm:$0xff] %vm686, %v684
          %688 = vst.msk [vmem:[#allocation2 + $0x8] sm:$0xff] %vm686, %v685
        $region88: #{gpt2_encoder_forward.1} parent=83 // pred_fallthru
          _
        %v689 = vld [vmem:[#allocation2] sm:$0xff]
        %v690 = vld [vmem:[#allocation2 + $0x8] sm:$0xff]
        %v691 = vld [vmem:[%s638] sm:$0x1]
        %v692 = vld [vmem:[%s641] sm:$0x1]
        %vm693 = vcmask 261120
        %v694 = vsel %vm693, %v689, 0.0
        %695 = vadd.xlane.f32.xlu0 %v694
        %v696 = vpop.xlane.xlu0 %695
        %v697 = vsel %vm693, %v690, 0.0
        %698 = vadd.xlane.f32.xlu0 %v697
        %v699 = vpop.xlane.xlu0 %698
        %v700 = vrcp.pop 32.0
        %v701 = vmul.f32 32.0, %v700
        %v702 = vsub.f32 1.0, %v701
        %v703 = vmul.f32 %v700, %v702
        %v704 = vadd.f32 %v700, %v703
        %vm705 = vweird.f32 %v700
        %v706 = vsel %vm705, %v700, %v704
        %v707 = vmul.f32 %v696, %v706
        %v708 = vmul.f32 %v699, %v706
        %v709 = vsub.f32 %v689, %v707
        %v710 = vsub.f32 %v690, %v708
        %v711 = vmul.f32 %v709, %v709
        %v712 = vmul.f32 %v710, %v710
        %v713 = vsel %vm693, %v711, 0.0
        %714 = vadd.xlane.f32.xlu0 %v713
        %v715 = vpop.xlane.xlu0 %714
        %v716 = vsel %vm693, %v712, 0.0
        %717 = vadd.xlane.f32.xlu0 %v716
        %v718 = vpop.xlane.xlu0 %717
        %v719 = vmul.f32 %v715, %v706
        %v720 = vmul.f32 %v718, %v706
        %v721 = vadd.f32 %v719, 1e-05
        %v722 = vadd.f32 %v720, 1e-05
        %v723 = vrsqrt.pop %v721
        %v724 = vmul.f32 %v723, %v721
        %v725 = vmul.f32 %v724, %v723
        %v726 = vmul.f32 0.5, %v725
        %v727 = vsub.f32 1.5, %v726
        %v728 = vmul.f32 %v723, %v727
        %vm729 = vweird.f32 %v721
        %vm730 = vweird.f32 %v723
        %vm731 = vmor %vm729, %vm730
        %v732 = vsel %vm731, %v723, %v728
        %v733 = vrsqrt.pop %v722
        %v734 = vmul.f32 %v733, %v722
        %v735 = vmul.f32 %v734, %v733
        %v736 = vmul.f32 0.5, %v735
        %v737 = vsub.f32 1.5, %v736
        %v738 = vmul.f32 %v733, %v737
        %vm739 = vweird.f32 %v722
        %vm740 = vweird.f32 %v733
        %vm741 = vmor %vm739, %vm740
        %v742 = vsel %vm741, %v733, %v738
        %v743 = vmul.f32 %v709, %v732
        %v744 = vmul.f32 %v710, %v742
        %v746 = vperm.slane %v691, 0
        %v748 = vmul.f32 %v743, %v746
        %v749 = vmul.f32 %v744, %v746
        %v751 = vperm.slane %v692, 0
        %v753 = vadd.f32 %v748, %v751
        %v754 = vadd.f32 %v749, %v751
        %v755 = vld [vmem:[%s646] sm:$0xff]
        %v756 = vld [vmem:[%s646 + $0x8] sm:$0xff]
        %v757 = vld [vmem:[%s646 + $0x10] sm:$0xff]
        %v758 = vld [vmem:[%s646 + $0x18] sm:$0xff]
        %v759 = vld [vmem:[%s649] sm:$0x1]
        %v761 = vperm.slane %v759, 0
        %v764 = vsel %vm693, %v753, 0
        %v767 = vsel %vm693, %v754, 0
        %769 = vmatpush.msra.mxu0 0.0
        %770 = vmatpush.msra.mxu0 0.0
        %771 = vmatpush.msra.mxu0 0.0
        %772 = vmatpush.msra.mxu0 0.0
        %773 = vmatpush.msra.mxu0 0.0
        %774 = vmatpush.msra.mxu0 0.0
        %775 = vmatpush.msra.mxu0 0.0
        %776 = vmatpush.msra.mxu0 0.0
        %777 = vmatpush.msra.mxu0 0.0
        %778 = vmatpush.msra.mxu0 0.0
        %779 = vmatpush.msra.mxu0 0.0
        %780 = vmatpush.msra.mxu0 0.0
        %781 = vmatpush.msra.mxu0 %v758
        %782 = vmatpush.msra.mxu0 %v757
        %783 = vmatpush.msra.mxu0 %v756
        %784 = vmatpush.msra.mxu0 %v755
        %785 = vmatmul.f32.gmra.mxu0 %v764
        %v786 = vpop.f32.mrf.mxu0
        %v787 = vadd.f32 %v761, %v786
        %788 = vmatmul.f32.gmra.mxu0 %v767
        %v789 = vpop.f32.mrf.mxu0
        %v790 = vadd.f32 %v761, %v789
        %791 = vdwg.mxu0
        %v792 = vld [vmem:[%s1] sm:$0xff]
        %794 = vrot.lane.b32.xlu0 %v787, 96
        %v795 = vpop.permute.xlu0 %794
        %vm796 = vcmask 64512
        %v797 = vsel %vm796, %v787, 0
        %v799 = vsel %vm796, %v795, 0
        %801 = vmatpush.xpose.msra.mxu0 0.0
        %802 = vmatpush.xpose.msra.mxu0 0.0
        %803 = vmatpush.xpose.msra.mxu0 0.0
        %804 = vmatpush.xpose.msra.mxu0 0.0
        %805 = vmatpush.xpose.msra.mxu0 0.0
        %806 = vmatpush.xpose.msra.mxu0 0.0
        %807 = vmatpush.xpose.msra.mxu0 0.0
        %808 = vmatpush.xpose.msra.mxu0 0.0
        %809 = vmatpush.xpose.msra.mxu0 0.0
        %810 = vmatpush.xpose.msra.mxu0 0.0
        %811 = vmatpush.xpose.msra.mxu0 0.0
        %812 = vmatpush.xpose.msra.mxu0 0.0
        %813 = vmatpush.xpose.msra.mxu0 0.0
        %814 = vmatpush.xpose.msra.mxu0 0.0
        %815 = vmatpush.xpose.msra.mxu0 0.0
        %816 = vmatpush.xpose.msra.mxu0 %v799
        %817 = vmatmul.f32.gmra.mxu0 %v797
        %v818 = vpop.f32.mrf.mxu0
        %v819 = vadd.f32 0.0, %v818
        %820 = vdwg.mxu0
        %v821 = vmul.f32 %v819, 0.35355338
        %v822 = vadd.f32 %v821, %v792
        %v823 = vsel %vm796, %v822, -inf
        %824 = vmax.xlane.f32.xlu0 %v823
        %v825 = vpop.xlane.xlu0 %824
        %v826 = vsub.f32 %v822, %v825
        %v827 = vmul.f32 %v826, 1.442695
        %v828 = vpow.pop %v827
        %v829 = vsel %vm796, %v828, 0.0
        %830 = vadd.xlane.f32.xlu0 %v829
        %v831 = vpop.xlane.xlu0 %830
        %v832 = vrcp.pop %v831
        %v833 = vmul.f32 %v828, %v832
        %834 = vrot.lane.b32.xlu0 %v787, 64
        %v835 = vpop.permute.xlu0 %834
        %v838 = vsel %vm796, %v833, 0
        %840 = vmatpush.msra.mxu0 0.0
        %841 = vmatpush.msra.mxu0 0.0
        %842 = vmatpush.msra.mxu0 0.0
        %843 = vmatpush.msra.mxu0 0.0
        %844 = vmatpush.msra.mxu0 0.0
        %845 = vmatpush.msra.mxu0 0.0
        %846 = vmatpush.msra.mxu0 0.0
        %847 = vmatpush.msra.mxu0 0.0
        %848 = vmatpush.msra.mxu0 0.0
        %849 = vmatpush.msra.mxu0 0.0
        %850 = vmatpush.msra.mxu0 0.0
        %851 = vmatpush.msra.mxu0 0.0
        %852 = vmatpush.msra.mxu0 0.0
        %853 = vmatpush.msra.mxu0 0.0
        %854 = vmatpush.msra.mxu0 0.0
        %855 = vmatpush.msra.mxu0 %v835
        %856 = vmatmul.f32.gmra.mxu0 %v838
        %v857 = vpop.f32.mrf.mxu0
        %v858 = vadd.f32 0.0, %v857
        %859 = vdwg.mxu0
        %860 = vst.msk [vmem:[#allocation3] sm:$0xff] %vm796, %v858
        %861 = vrot.lane.b32.xlu0 %v787, 120
        %v862 = vpop.permute.xlu0 %861
        %863 = vrot.lane.b32.xlu0 %v787, 88
        %v864 = vpop.permute.xlu0 %863
        %v865 = vsel %vm796, %v862, 0
        %v867 = vsel %vm796, %v864, 0
        %869 = vmatpush.xpose.msra.mxu0 0.0
        %870 = vmatpush.xpose.msra.mxu0 0.0
        %871 = vmatpush.xpose.msra.mxu0 0.0
        %872 = vmatpush.xpose.msra.mxu0 0.0
        %873 = vmatpush.xpose.msra.mxu0 0.0
        %874 = vmatpush.xpose.msra.mxu0 0.0
        %875 = vmatpush.xpose.msra.mxu0 0.0
        %876 = vmatpush.xpose.msra.mxu0 0.0
        %877 = vmatpush.xpose.msra.mxu0 0.0
        %878 = vmatpush.xpose.msra.mxu0 0.0
        %879 = vmatpush.xpose.msra.mxu0 0.0
        %880 = vmatpush.xpose.msra.mxu0 0.0
        %881 = vmatpush.xpose.msra.mxu0 0.0
        %882 = vmatpush.xpose.msra.mxu0 0.0
        %883 = vmatpush.xpose.msra.mxu0 0.0
        %884 = vmatpush.xpose.msra.mxu0 %v867
        %885 = vmatmul.f32.gmra.mxu0 %v865
        %v886 = vpop.f32.mrf.mxu0
        %v887 = vadd.f32 0.0, %v886
        %888 = vdwg.mxu0
        %v889 = vmul.f32 %v887, 0.35355338
        %v890 = vadd.f32 %v889, %v792
        %v891 = vsel %vm796, %v890, -inf
        %892 = vmax.xlane.f32.xlu0 %v891
        %v893 = vpop.xlane.xlu0 %892
        %v894 = vsub.f32 %v890, %v893
        %v895 = vmul.f32 %v894, 1.442695
        %v896 = vpow.pop %v895
        %v897 = vsel %vm796, %v896, 0.0
        %898 = vadd.xlane.f32.xlu0 %v897
        %v899 = vpop.xlane.xlu0 %898
        %v900 = vrcp.pop %v899
        %v901 = vmul.f32 %v896, %v900
        %902 = vrot.lane.b32.xlu0 %v787, 56
        %v903 = vpop.permute.xlu0 %902
        %v906 = vsel %vm796, %v901, 0
        %908 = vmatpush.msra.mxu0 0.0
        %909 = vmatpush.msra.mxu0 0.0
        %910 = vmatpush.msra.mxu0 0.0
        %911 = vmatpush.msra.mxu0 0.0
        %912 = vmatpush.msra.mxu0 0.0
        %913 = vmatpush.msra.mxu0 0.0
        %914 = vmatpush.msra.mxu0 0.0
        %915 = vmatpush.msra.mxu0 0.0
        %916 = vmatpush.msra.mxu0 0.0
        %917 = vmatpush.msra.mxu0 0.0
        %918 = vmatpush.msra.mxu0 0.0
        %919 = vmatpush.msra.mxu0 0.0
        %920 = vmatpush.msra.mxu0 0.0
        %921 = vmatpush.msra.mxu0 0.0
        %922 = vmatpush.msra.mxu0 0.0
        %923 = vmatpush.msra.mxu0 %v903
        %924 = vmatmul.f32.gmra.mxu0 %v906
        %v925 = vpop.f32.mrf.mxu0
        %v926 = vadd.f32 0.0, %v925
        %927 = vdwg.mxu0
        %929 = vrot.lane.b32.xlu0 %v926, 8
        %v930 = vpop.permute.xlu0 %929
        %vm932 = vcmask 130112
        %933 = vst.msk [vmem:[#allocation3] sm:$0xff] %vm932, %v930
        %934 = vrot.lane.b32.xlu0 %v787, 112
        %v935 = vpop.permute.xlu0 %934
        %936 = vrot.lane.b32.xlu0 %v787, 80
        %v937 = vpop.permute.xlu0 %936
        %v938 = vsel %vm796, %v935, 0
        %v940 = vsel %vm796, %v937, 0
        %942 = vmatpush.xpose.msra.mxu0 0.0
        %943 = vmatpush.xpose.msra.mxu0 0.0
        %944 = vmatpush.xpose.msra.mxu0 0.0
        %945 = vmatpush.xpose.msra.mxu0 0.0
        %946 = vmatpush.xpose.msra.mxu0 0.0
        %947 = vmatpush.xpose.msra.mxu0 0.0
        %948 = vmatpush.xpose.msra.mxu0 0.0
        %949 = vmatpush.xpose.msra.mxu0 0.0
        %950 = vmatpush.xpose.msra.mxu0 0.0
        %951 = vmatpush.xpose.msra.mxu0 0.0
        %952 = vmatpush.xpose.msra.mxu0 0.0
        %953 = vmatpush.xpose.msra.mxu0 0.0
        %954 = vmatpush.xpose.msra.mxu0 0.0
        %955 = vmatpush.xpose.msra.mxu0 0.0
        %956 = vmatpush.xpose.msra.mxu0 0.0
        %957 = vmatpush.xpose.msra.mxu0 %v940
        %958 = vmatmul.f32.gmra.mxu0 %v938
        %v959 = vpop.f32.mrf.mxu0
        %v960 = vadd.f32 0.0, %v959
        %961 = vdwg.mxu0
        %v962 = vmul.f32 %v960, 0.35355338
        %v963 = vadd.f32 %v962, %v792
        %v964 = vsel %vm796, %v963, -inf
        %965 = vmax.xlane.f32.xlu0 %v964
        %v966 = vpop.xlane.xlu0 %965
        %v967 = vsub.f32 %v963, %v966
        %v968 = vmul.f32 %v967, 1.442695
        %v969 = vpow.pop %v968
        %v970 = vsel %vm796, %v969, 0.0
        %971 = vadd.xlane.f32.xlu0 %v970
        %v972 = vpop.xlane.xlu0 %971
        %v973 = vrcp.pop %v972
        %v974 = vmul.f32 %v969, %v973
        %975 = vrot.lane.b32.xlu0 %v787, 48
        %v976 = vpop.permute.xlu0 %975
        %v979 = vsel %vm796, %v974, 0
        %981 = vmatpush.msra.mxu0 0.0
        %982 = vmatpush.msra.mxu0 0.0
        %983 = vmatpush.msra.mxu0 0.0
        %984 = vmatpush.msra.mxu0 0.0
        %985 = vmatpush.msra.mxu0 0.0
        %986 = vmatpush.msra.mxu0 0.0
        %987 = vmatpush.msra.mxu0 0.0
        %988 = vmatpush.msra.mxu0 0.0
        %989 = vmatpush.msra.mxu0 0.0
        %990 = vmatpush.msra.mxu0 0.0
        %991 = vmatpush.msra.mxu0 0.0
        %992 = vmatpush.msra.mxu0 0.0
        %993 = vmatpush.msra.mxu0 0.0
        %994 = vmatpush.msra.mxu0 0.0
        %995 = vmatpush.msra.mxu0 0.0
        %996 = vmatpush.msra.mxu0 %v976
        %997 = vmatmul.f32.gmra.mxu0 %v979
        %v998 = vpop.f32.mrf.mxu0
        %v999 = vadd.f32 0.0, %v998
        %1000 = vdwg.mxu0
        %1002 = vrot.lane.b32.xlu0 %v999, 16
        %v1003 = vpop.permute.xlu0 %1002
        %vm1005 = vcmask 195712
        %1006 = vst.msk [vmem:[#allocation3] sm:$0xff] %vm1005, %v1003
        %1007 = vrot.lane.b32.xlu0 %v787, 104
        %v1008 = vpop.permute.xlu0 %1007
        %1009 = vrot.lane.b32.xlu0 %v787, 72
        %v1010 = vpop.permute.xlu0 %1009
        %v1011 = vsel %vm796, %v1008, 0
        %v1013 = vsel %vm796, %v1010, 0
        %1015 = vmatpush.xpose.msra.mxu0 0.0
        %1016 = vmatpush.xpose.msra.mxu0 0.0
        %1017 = vmatpush.xpose.msra.mxu0 0.0
        %1018 = vmatpush.xpose.msra.mxu0 0.0
        %1019 = vmatpush.xpose.msra.mxu0 0.0
        %1020 = vmatpush.xpose.msra.mxu0 0.0
        %1021 = vmatpush.xpose.msra.mxu0 0.0
        %1022 = vmatpush.xpose.msra.mxu0 0.0
        %1023 = vmatpush.xpose.msra.mxu0 0.0
        %1024 = vmatpush.xpose.msra.mxu0 0.0
        %1025 = vmatpush.xpose.msra.mxu0 0.0
        %1026 = vmatpush.xpose.msra.mxu0 0.0
        %1027 = vmatpush.xpose.msra.mxu0 0.0
        %1028 = vmatpush.xpose.msra.mxu0 0.0
        %1029 = vmatpush.xpose.msra.mxu0 0.0
        %1030 = vmatpush.xpose.msra.mxu0 %v1013
        %1031 = vmatmul.f32.gmra.mxu0 %v1011
        %v1032 = vpop.f32.mrf.mxu0
        %v1033 = vadd.f32 0.0, %v1032
        %1034 = vdwg.mxu0
        %v1035 = vmul.f32 %v1033, 0.35355338
        %v1036 = vadd.f32 %v1035, %v792
        %v1037 = vsel %vm796, %v1036, -inf
        %1038 = vmax.xlane.f32.xlu0 %v1037
        %v1039 = vpop.xlane.xlu0 %1038
        %v1040 = vsub.f32 %v1036, %v1039
        %v1041 = vmul.f32 %v1040, 1.442695
        %v1042 = vpow.pop %v1041
        %v1043 = vsel %vm796, %v1042, 0.0
        %1044 = vadd.xlane.f32.xlu0 %v1043
        %v1045 = vpop.xlane.xlu0 %1044
        %v1046 = vrcp.pop %v1045
        %v1047 = vmul.f32 %v1042, %v1046
        %1048 = vrot.lane.b32.xlu0 %v787, 40
        %v1049 = vpop.permute.xlu0 %1048
        %v1052 = vsel %vm796, %v1047, 0
        %1054 = vmatpush.msra.mxu0 0.0
        %1055 = vmatpush.msra.mxu0 0.0
        %1056 = vmatpush.msra.mxu0 0.0
        %1057 = vmatpush.msra.mxu0 0.0
        %1058 = vmatpush.msra.mxu0 0.0
        %1059 = vmatpush.msra.mxu0 0.0
        %1060 = vmatpush.msra.mxu0 0.0
        %1061 = vmatpush.msra.mxu0 0.0
        %1062 = vmatpush.msra.mxu0 0.0
        %1063 = vmatpush.msra.mxu0 0.0
        %1064 = vmatpush.msra.mxu0 0.0
        %1065 = vmatpush.msra.mxu0 0.0
        %1066 = vmatpush.msra.mxu0 0.0
        %1067 = vmatpush.msra.mxu0 0.0
        %1068 = vmatpush.msra.mxu0 0.0
        %1069 = vmatpush.msra.mxu0 %v1049
        %1070 = vmatmul.f32.gmra.mxu0 %v1052
        %v1071 = vpop.f32.mrf.mxu0
        %v1072 = vadd.f32 0.0, %v1071
        %1073 = vdwg.mxu0
        %1075 = vrot.lane.b32.xlu0 %v1072, 24
        %v1076 = vpop.permute.xlu0 %1075
        %vm1078 = vcmask 261312
        %1079 = vst.msk [vmem:[#allocation3] sm:$0xff] %vm1078, %v1076
        %s1080 = scalar_lea.vmem %s1, 8
        %v1081 = vld [vmem:[%s1080] sm:$0xff]
        %1083 = vrot.lane.b32.xlu0 %v790, 96
        %v1084 = vpop.permute.xlu0 %1083
        %v1085 = vsel %vm796, %v790, 0
        %v1087 = vsel %vm796, %v1084, 0
        %1089 = vmatpush.xpose.msra.mxu0 0.0
        %1090 = vmatpush.xpose.msra.mxu0 0.0
        %1091 = vmatpush.xpose.msra.mxu0 0.0
        %1092 = vmatpush.xpose.msra.mxu0 0.0
        %1093 = vmatpush.xpose.msra.mxu0 0.0
        %1094 = vmatpush.xpose.msra.mxu0 0.0
        %1095 = vmatpush.xpose.msra.mxu0 0.0
        %1096 = vmatpush.xpose.msra.mxu0 0.0
        %1097 = vmatpush.xpose.msra.mxu0 0.0
        %1098 = vmatpush.xpose.msra.mxu0 0.0
        %1099 = vmatpush.xpose.msra.mxu0 0.0
        %1100 = vmatpush.xpose.msra.mxu0 0.0
        %1101 = vmatpush.xpose.msra.mxu0 0.0
        %1102 = vmatpush.xpose.msra.mxu0 0.0
        %1103 = vmatpush.xpose.msra.mxu0 0.0
        %1104 = vmatpush.xpose.msra.mxu0 %v1087
        %1105 = vmatmul.f32.gmra.mxu0 %v1085
        %v1106 = vpop.f32.mrf.mxu0
        %v1107 = vadd.f32 0.0, %v1106
        %1108 = vdwg.mxu0
        %v1109 = vmul.f32 %v1107, 0.35355338
        %v1110 = vadd.f32 %v1109, %v1081
        %v1111 = vsel %vm796, %v1110, -inf
        %1112 = vmax.xlane.f32.xlu0 %v1111
        %v1113 = vpop.xlane.xlu0 %1112
        %v1114 = vsub.f32 %v1110, %v1113
        %v1115 = vmul.f32 %v1114, 1.442695
        %v1116 = vpow.pop %v1115
        %v1117 = vsel %vm796, %v1116, 0.0
        %1118 = vadd.xlane.f32.xlu0 %v1117
        %v1119 = vpop.xlane.xlu0 %1118
        %v1120 = vrcp.pop %v1119
        %v1121 = vmul.f32 %v1116, %v1120
        %1122 = vrot.lane.b32.xlu0 %v790, 64
        %v1123 = vpop.permute.xlu0 %1122
        %v1126 = vsel %vm796, %v1121, 0
        %1128 = vmatpush.msra.mxu0 0.0
        %1129 = vmatpush.msra.mxu0 0.0
        %1130 = vmatpush.msra.mxu0 0.0
        %1131 = vmatpush.msra.mxu0 0.0
        %1132 = vmatpush.msra.mxu0 0.0
        %1133 = vmatpush.msra.mxu0 0.0
        %1134 = vmatpush.msra.mxu0 0.0
        %1135 = vmatpush.msra.mxu0 0.0
        %1136 = vmatpush.msra.mxu0 0.0
        %1137 = vmatpush.msra.mxu0 0.0
        %1138 = vmatpush.msra.mxu0 0.0
        %1139 = vmatpush.msra.mxu0 0.0
        %1140 = vmatpush.msra.mxu0 0.0
        %1141 = vmatpush.msra.mxu0 0.0
        %1142 = vmatpush.msra.mxu0 0.0
        %1143 = vmatpush.msra.mxu0 %v1123
        %1144 = vmatmul.f32.gmra.mxu0 %v1126
        %v1145 = vpop.f32.mrf.mxu0
        %v1146 = vadd.f32 0.0, %v1145
        %1147 = vdwg.mxu0
        %1148 = vst.msk [vmem:[#allocation3 + $0x8] sm:$0xff] %vm796, %v1146
        %1149 = vrot.lane.b32.xlu0 %v790, 120
        %v1150 = vpop.permute.xlu0 %1149
        %1151 = vrot.lane.b32.xlu0 %v790, 88
        %v1152 = vpop.permute.xlu0 %1151
        %v1153 = vsel %vm796, %v1150, 0
        %v1155 = vsel %vm796, %v1152, 0
        %1157 = vmatpush.xpose.msra.mxu0 0.0
        %1158 = vmatpush.xpose.msra.mxu0 0.0
        %1159 = vmatpush.xpose.msra.mxu0 0.0
        %1160 = vmatpush.xpose.msra.mxu0 0.0
        %1161 = vmatpush.xpose.msra.mxu0 0.0
        %1162 = vmatpush.xpose.msra.mxu0 0.0
        %1163 = vmatpush.xpose.msra.mxu0 0.0
        %1164 = vmatpush.xpose.msra.mxu0 0.0
        %1165 = vmatpush.xpose.msra.mxu0 0.0
        %1166 = vmatpush.xpose.msra.mxu0 0.0
        %1167 = vmatpush.xpose.msra.mxu0 0.0
        %1168 = vmatpush.xpose.msra.mxu0 0.0
        %1169 = vmatpush.xpose.msra.mxu0 0.0
        %1170 = vmatpush.xpose.msra.mxu0 0.0
        %1171 = vmatpush.xpose.msra.mxu0 0.0
        %1172 = vmatpush.xpose.msra.mxu0 %v1155
        %1173 = vmatmul.f32.gmra.mxu0 %v1153
        %v1174 = vpop.f32.mrf.mxu0
        %v1175 = vadd.f32 0.0, %v1174
        %1176 = vdwg.mxu0
        %v1177 = vmul.f32 %v1175, 0.35355338
        %v1178 = vadd.f32 %v1177, %v1081
        %v1179 = vsel %vm796, %v1178, -inf
        %1180 = vmax.xlane.f32.xlu0 %v1179
        %v1181 = vpop.xlane.xlu0 %1180
        %v1182 = vsub.f32 %v1178, %v1181
        %v1183 = vmul.f32 %v1182, 1.442695
        %v1184 = vpow.pop %v1183
        %v1185 = vsel %vm796, %v1184, 0.0
        %1186 = vadd.xlane.f32.xlu0 %v1185
        %v1187 = vpop.xlane.xlu0 %1186
        %v1188 = vrcp.pop %v1187
        %v1189 = vmul.f32 %v1184, %v1188
        %1190 = vrot.lane.b32.xlu0 %v790, 56
        %v1191 = vpop.permute.xlu0 %1190
        %v1194 = vsel %vm796, %v1189, 0
        %1196 = vmatpush.msra.mxu0 0.0
        %1197 = vmatpush.msra.mxu0 0.0
        %1198 = vmatpush.msra.mxu0 0.0
        %1199 = vmatpush.msra.mxu0 0.0
        %1200 = vmatpush.msra.mxu0 0.0
        %1201 = vmatpush.msra.mxu0 0.0
        %1202 = vmatpush.msra.mxu0 0.0
        %1203 = vmatpush.msra.mxu0 0.0
        %1204 = vmatpush.msra.mxu0 0.0
        %1205 = vmatpush.msra.mxu0 0.0
        %1206 = vmatpush.msra.mxu0 0.0
        %1207 = vmatpush.msra.mxu0 0.0
        %1208 = vmatpush.msra.mxu0 0.0
        %1209 = vmatpush.msra.mxu0 0.0
        %1210 = vmatpush.msra.mxu0 0.0
        %1211 = vmatpush.msra.mxu0 %v1191
        %1212 = vmatmul.f32.gmra.mxu0 %v1194
        %v1213 = vpop.f32.mrf.mxu0
        %v1214 = vadd.f32 0.0, %v1213
        %1215 = vdwg.mxu0
        %1217 = vrot.lane.b32.xlu0 %v1214, 8
        %v1218 = vpop.permute.xlu0 %1217
        %1220 = vst.msk [vmem:[#allocation3 + $0x8] sm:$0xff] %vm932, %v1218
        %1221 = vrot.lane.b32.xlu0 %v790, 112
        %v1222 = vpop.permute.xlu0 %1221
        %1223 = vrot.lane.b32.xlu0 %v790, 80
        %v1224 = vpop.permute.xlu0 %1223
        %v1225 = vsel %vm796, %v1222, 0
        %v1227 = vsel %vm796, %v1224, 0
        %1229 = vmatpush.xpose.msra.mxu0 0.0
        %1230 = vmatpush.xpose.msra.mxu0 0.0
        %1231 = vmatpush.xpose.msra.mxu0 0.0
        %1232 = vmatpush.xpose.msra.mxu0 0.0
        %1233 = vmatpush.xpose.msra.mxu0 0.0
        %1234 = vmatpush.xpose.msra.mxu0 0.0
        %1235 = vmatpush.xpose.msra.mxu0 0.0
        %1236 = vmatpush.xpose.msra.mxu0 0.0
        %1237 = vmatpush.xpose.msra.mxu0 0.0
        %1238 = vmatpush.xpose.msra.mxu0 0.0
        %1239 = vmatpush.xpose.msra.mxu0 0.0
        %1240 = vmatpush.xpose.msra.mxu0 0.0
        %1241 = vmatpush.xpose.msra.mxu0 0.0
        %1242 = vmatpush.xpose.msra.mxu0 0.0
        %1243 = vmatpush.xpose.msra.mxu0 0.0
        %1244 = vmatpush.xpose.msra.mxu0 %v1227
        %1245 = vmatmul.f32.gmra.mxu0 %v1225
        %v1246 = vpop.f32.mrf.mxu0
        %v1247 = vadd.f32 0.0, %v1246
        %1248 = vdwg.mxu0
        %v1249 = vmul.f32 %v1247, 0.35355338
        %v1250 = vadd.f32 %v1249, %v1081
        %v1251 = vsel %vm796, %v1250, -inf
        %1252 = vmax.xlane.f32.xlu0 %v1251
        %v1253 = vpop.xlane.xlu0 %1252
        %v1254 = vsub.f32 %v1250, %v1253
        %v1255 = vmul.f32 %v1254, 1.442695
        %v1256 = vpow.pop %v1255
        %v1257 = vsel %vm796, %v1256, 0.0
        %1258 = vadd.xlane.f32.xlu0 %v1257
        %v1259 = vpop.xlane.xlu0 %1258
        %v1260 = vrcp.pop %v1259
        %v1261 = vmul.f32 %v1256, %v1260
        %1262 = vrot.lane.b32.xlu0 %v790, 48
        %v1263 = vpop.permute.xlu0 %1262
        %v1266 = vsel %vm796, %v1261, 0
        %1268 = vmatpush.msra.mxu0 0.0
        %1269 = vmatpush.msra.mxu0 0.0
        %1270 = vmatpush.msra.mxu0 0.0
        %1271 = vmatpush.msra.mxu0 0.0
        %1272 = vmatpush.msra.mxu0 0.0
        %1273 = vmatpush.msra.mxu0 0.0
        %1274 = vmatpush.msra.mxu0 0.0
        %1275 = vmatpush.msra.mxu0 0.0
        %1276 = vmatpush.msra.mxu0 0.0
        %1277 = vmatpush.msra.mxu0 0.0
        %1278 = vmatpush.msra.mxu0 0.0
        %1279 = vmatpush.msra.mxu0 0.0
        %1280 = vmatpush.msra.mxu0 0.0
        %1281 = vmatpush.msra.mxu0 0.0
        %1282 = vmatpush.msra.mxu0 0.0
        %1283 = vmatpush.msra.mxu0 %v1263
        %1284 = vmatmul.f32.gmra.mxu0 %v1266
        %v1285 = vpop.f32.mrf.mxu0
        %v1286 = vadd.f32 0.0, %v1285
        %1287 = vdwg.mxu0
        %1289 = vrot.lane.b32.xlu0 %v1286, 16
        %v1290 = vpop.permute.xlu0 %1289
        %1292 = vst.msk [vmem:[#allocation3 + $0x8] sm:$0xff] %vm1005, %v1290
        %1293 = vrot.lane.b32.xlu0 %v790, 104
        %v1294 = vpop.permute.xlu0 %1293
        %1295 = vrot.lane.b32.xlu0 %v790, 72
        %v1296 = vpop.permute.xlu0 %1295
        %v1297 = vsel %vm796, %v1294, 0
        %v1299 = vsel %vm796, %v1296, 0
        %1301 = vmatpush.xpose.msra.mxu0 0.0
        %1302 = vmatpush.xpose.msra.mxu0 0.0
        %1303 = vmatpush.xpose.msra.mxu0 0.0
        %1304 = vmatpush.xpose.msra.mxu0 0.0
        %1305 = vmatpush.xpose.msra.mxu0 0.0
        %1306 = vmatpush.xpose.msra.mxu0 0.0
        %1307 = vmatpush.xpose.msra.mxu0 0.0
        %1308 = vmatpush.xpose.msra.mxu0 0.0
        %1309 = vmatpush.xpose.msra.mxu0 0.0
        %1310 = vmatpush.xpose.msra.mxu0 0.0
        %1311 = vmatpush.xpose.msra.mxu0 0.0
        %1312 = vmatpush.xpose.msra.mxu0 0.0
        %1313 = vmatpush.xpose.msra.mxu0 0.0
        %1314 = vmatpush.xpose.msra.mxu0 0.0
        %1315 = vmatpush.xpose.msra.mxu0 0.0
        %1316 = vmatpush.xpose.msra.mxu0 %v1299
        %1317 = vmatmul.f32.gmra.mxu0 %v1297
        %v1318 = vpop.f32.mrf.mxu0
        %v1319 = vadd.f32 0.0, %v1318
        %1320 = vdwg.mxu0
        %v1321 = vmul.f32 %v1319, 0.35355338
        %v1322 = vadd.f32 %v1321, %v1081
        %v1323 = vsel %vm796, %v1322, -inf
        %1324 = vmax.xlane.f32.xlu0 %v1323
        %v1325 = vpop.xlane.xlu0 %1324
        %v1326 = vsub.f32 %v1322, %v1325
        %v1327 = vmul.f32 %v1326, 1.442695
        %v1328 = vpow.pop %v1327
        %v1329 = vsel %vm796, %v1328, 0.0
        %1330 = vadd.xlane.f32.xlu0 %v1329
        %v1331 = vpop.xlane.xlu0 %1330
        %v1332 = vrcp.pop %v1331
        %v1333 = vmul.f32 %v1328, %v1332
        %1334 = vrot.lane.b32.xlu0 %v790, 40
        %v1335 = vpop.permute.xlu0 %1334
        %v1338 = vsel %vm796, %v1333, 0
        %1340 = vmatpush.msra.mxu0 0.0
        %1341 = vmatpush.msra.mxu0 0.0
        %1342 = vmatpush.msra.mxu0 0.0
        %1343 = vmatpush.msra.mxu0 0.0
        %1344 = vmatpush.msra.mxu0 0.0
        %1345 = vmatpush.msra.mxu0 0.0
        %1346 = vmatpush.msra.mxu0 0.0
        %1347 = vmatpush.msra.mxu0 0.0
        %1348 = vmatpush.msra.mxu0 0.0
        %1349 = vmatpush.msra.mxu0 0.0
        %1350 = vmatpush.msra.mxu0 0.0
        %1351 = vmatpush.msra.mxu0 0.0
        %1352 = vmatpush.msra.mxu0 0.0
        %1353 = vmatpush.msra.mxu0 0.0
        %1354 = vmatpush.msra.mxu0 0.0
        %1355 = vmatpush.msra.mxu0 %v1335
        %1356 = vmatmul.f32.gmra.mxu0 %v1338
        %v1357 = vpop.f32.mrf.mxu0
        %v1358 = vadd.f32 0.0, %v1357
        %1359 = vdwg.mxu0
        %1361 = vrot.lane.b32.xlu0 %v1358, 24
        %v1362 = vpop.permute.xlu0 %1361
        %1364 = vst.msk [vmem:[#allocation3 + $0x8] sm:$0xff] %vm1078, %v1362
        %v1365 = vld [vmem:[#allocation3] sm:$0xff]
        %v1366 = vld [vmem:[#allocation3 + $0x8] sm:$0xff]
        %v1367 = vld [vmem:[%s654] sm:$0xff]
        %v1368 = vld [vmem:[%s654 + $0x8] sm:$0xff]
        %v1369 = vld [vmem:[%s654 + $0x10] sm:$0xff]
        %v1370 = vld [vmem:[%s654 + $0x18] sm:$0xff]
        %v1371 = vld [vmem:[%s657] sm:$0x1]
        %v1373 = vperm.slane %v1371, 0
        %v1376 = vsel %vm693, %v1365, 0
        %v1379 = vsel %vm693, %v1366, 0
        %1381 = vmatpush.msra.mxu0 0.0
        %1382 = vmatpush.msra.mxu0 0.0
        %1383 = vmatpush.msra.mxu0 0.0
        %1384 = vmatpush.msra.mxu0 0.0
        %1385 = vmatpush.msra.mxu0 0.0
        %1386 = vmatpush.msra.mxu0 0.0
        %1387 = vmatpush.msra.mxu0 0.0
        %1388 = vmatpush.msra.mxu0 0.0
        %1389 = vmatpush.msra.mxu0 0.0
        %1390 = vmatpush.msra.mxu0 0.0
        %1391 = vmatpush.msra.mxu0 0.0
        %1392 = vmatpush.msra.mxu0 0.0
        %1393 = vmatpush.msra.mxu0 %v1370
        %1394 = vmatpush.msra.mxu0 %v1369
        %1395 = vmatpush.msra.mxu0 %v1368
        %1396 = vmatpush.msra.mxu0 %v1367
        %1397 = vmatmul.f32.gmra.mxu0 %v1376
        %v1398 = vpop.f32.mrf.mxu0
        %v1399 = vadd.f32 %v1373, %v1398
        %1400 = vmatmul.f32.gmra.mxu0 %v1379
        %v1401 = vpop.f32.mrf.mxu0
        %v1402 = vadd.f32 %v1373, %v1401
        %1403 = vdwg.mxu0
        %v1404 = vadd.f32 %v689, %v1399
        %v1405 = vadd.f32 %v690, %v1402
        %v1406 = vld [vmem:[%s660] sm:$0x1]
        %v1407 = vld [vmem:[%s663] sm:$0x1]
        %v1408 = vsel %vm693, %v1404, 0.0
        %1409 = vadd.xlane.f32.xlu0 %v1408
        %v1410 = vpop.xlane.xlu0 %1409
        %v1411 = vsel %vm693, %v1405, 0.0
        %1412 = vadd.xlane.f32.xlu0 %v1411
        %v1413 = vpop.xlane.xlu0 %1412
        %v1414 = vmul.f32 %v1410, %v706
        %v1415 = vmul.f32 %v1413, %v706
        %v1416 = vsub.f32 %v1404, %v1414
        %v1417 = vsub.f32 %v1405, %v1415
        %v1418 = vmul.f32 %v1416, %v1416
        %v1419 = vmul.f32 %v1417, %v1417
        %v1420 = vsel %vm693, %v1418, 0.0
        %1421 = vadd.xlane.f32.xlu0 %v1420
        %v1422 = vpop.xlane.xlu0 %1421
        %v1423 = vsel %vm693, %v1419, 0.0
        %1424 = vadd.xlane.f32.xlu0 %v1423
        %v1425 = vpop.xlane.xlu0 %1424
        %v1426 = vmul.f32 %v1422, %v706
        %v1427 = vmul.f32 %v1425, %v706
        %v1428 = vadd.f32 %v1426, 1e-05
        %v1429 = vadd.f32 %v1427, 1e-05
        %v1430 = vrsqrt.pop %v1428
        %v1431 = vmul.f32 %v1430, %v1428
        %v1432 = vmul.f32 %v1431, %v1430
        %v1433 = vmul.f32 0.5, %v1432
        %v1434 = vsub.f32 1.5, %v1433
        %v1435 = vmul.f32 %v1430, %v1434
        %vm1436 = vweird.f32 %v1428
        %vm1437 = vweird.f32 %v1430
        %vm1438 = vmor %vm1436, %vm1437
        %v1439 = vsel %vm1438, %v1430, %v1435
        %v1440 = vrsqrt.pop %v1429
        %v1441 = vmul.f32 %v1440, %v1429
        %v1442 = vmul.f32 %v1441, %v1440
        %v1443 = vmul.f32 0.5, %v1442
        %v1444 = vsub.f32 1.5, %v1443
        %v1445 = vmul.f32 %v1440, %v1444
        %vm1446 = vweird.f32 %v1429
        %vm1447 = vweird.f32 %v1440
        %vm1448 = vmor %vm1446, %vm1447
        %v1449 = vsel %vm1448, %v1440, %v1445
        %v1450 = vmul.f32 %v1416, %v1439
        %v1451 = vmul.f32 %v1417, %v1449
        %v1453 = vperm.slane %v1406, 0
        %v1455 = vmul.f32 %v1450, %v1453
        %v1456 = vmul.f32 %v1451, %v1453
        %v1458 = vperm.slane %v1407, 0
        %v1460 = vadd.f32 %v1455, %v1458
        %v1461 = vadd.f32 %v1456, %v1458
        %v1462 = vld [vmem:[%s668] sm:$0xff]
        %v1463 = vld [vmem:[%s668 + $0x8] sm:$0xff]
        %v1464 = vld [vmem:[%s668 + $0x10] sm:$0xff]
        %v1465 = vld [vmem:[%s668 + $0x18] sm:$0xff]
        %v1466 = vld [vmem:[%s671] sm:$0x1]
        %v1468 = vperm.slane %v1466, 0
        %v1471 = vsel %vm693, %v1460, 0
        %v1474 = vsel %vm693, %v1461, 0
        %1476 = vmatpush.msra.mxu0 0.0
        %1477 = vmatpush.msra.mxu0 0.0
        %1478 = vmatpush.msra.mxu0 0.0
        %1479 = vmatpush.msra.mxu0 0.0
        %1480 = vmatpush.msra.mxu0 0.0
        %1481 = vmatpush.msra.mxu0 0.0
        %1482 = vmatpush.msra.mxu0 0.0
        %1483 = vmatpush.msra.mxu0 0.0
        %1484 = vmatpush.msra.mxu0 0.0
        %1485 = vmatpush.msra.mxu0 0.0
        %1486 = vmatpush.msra.mxu0 0.0
        %1487 = vmatpush.msra.mxu0 0.0
        %1488 = vmatpush.msra.mxu0 %v1465
        %1489 = vmatpush.msra.mxu0 %v1464
        %1490 = vmatpush.msra.mxu0 %v1463
        %1491 = vmatpush.msra.mxu0 %v1462
        %1492 = vmatmul.f32.gmra.mxu0 %v1471
        %v1493 = vpop.f32.mrf.mxu0
        %v1494 = vadd.f32 %v1468, %v1493
        %1495 = vmatmul.f32.gmra.mxu0 %v1474
        %v1496 = vpop.f32.mrf.mxu0
        %v1497 = vadd.f32 %v1468, %v1496
        %1498 = vdwg.mxu0
        %v1499 = vmul.f32 %v1494, 0.5
        %v1500 = vmul.f32 %v1497, 0.5
        %v1501 = vmul.f32 %v1494, 0.044715
        %v1502 = vmul.f32 %v1497, 0.044715
        %v1503 = vmul.f32 %v1501, %v1494
        %v1504 = vmul.f32 %v1502, %v1497
        %v1505 = vmul.f32 %v1503, %v1494
        %v1506 = vmul.f32 %v1504, %v1497
        %v1507 = vadd.f32 %v1494, %v1505
        %v1508 = vadd.f32 %v1497, %v1506
        %v1509 = vmul.f32 %v1507, 0.7978846
        %v1510 = vmul.f32 %v1508, 0.7978846
        %v1511 = vtanh.pop %v1509
        %v1512 = vtanh.pop %v1510
        %v1513 = vadd.f32 %v1511, 1.0
        %v1514 = vadd.f32 %v1512, 1.0
        %v1515 = vmul.f32 %v1499, %v1513
        %v1516 = vmul.f32 %v1500, %v1514
        %v1517 = vld [vmem:[%s676] sm:$0xff]
        %v1518 = vld [vmem:[%s676 + $0x8] sm:$0xff]
        %v1519 = vld [vmem:[%s676 + $0x10] sm:$0xff]
        %v1520 = vld [vmem:[%s676 + $0x18] sm:$0xff]
        %v1521 = vld [vmem:[%s676 + $0x20] sm:$0xff]
        %v1522 = vld [vmem:[%s676 + $0x28] sm:$0xff]
        %v1523 = vld [vmem:[%s676 + $0x30] sm:$0xff]
        %v1524 = vld [vmem:[%s676 + $0x38] sm:$0xff]
        %v1525 = vld [vmem:[%s676 + $0x40] sm:$0xff]
        %v1526 = vld [vmem:[%s676 + $0x48] sm:$0xff]
        %v1527 = vld [vmem:[%s676 + $0x50] sm:$0xff]
        %v1528 = vld [vmem:[%s676 + $0x58] sm:$0xff]
        %v1529 = vld [vmem:[%s676 + $0x60] sm:$0xff]
        %v1530 = vld [vmem:[%s676 + $0x68] sm:$0xff]
        %v1531 = vld [vmem:[%s676 + $0x70] sm:$0xff]
        %v1532 = vld [vmem:[%s676 + $0x78] sm:$0xff]
        %v1533 = vld [vmem:[%s679] sm:$0x1]
        %v1535 = vperm.slane %v1533, 0
        %1537 = vmatpush.msra.mxu0 %v1532
        %1538 = vmatpush.msra.mxu0 %v1531
        %1539 = vmatpush.msra.mxu0 %v1530
        %1540 = vmatpush.msra.mxu0 %v1529
        %1541 = vmatpush.msra.mxu0 %v1528
        %1542 = vmatpush.msra.mxu0 %v1527
        %1543 = vmatpush.msra.mxu0 %v1526
        %1544 = vmatpush.msra.mxu0 %v1525
        %1545 = vmatpush.msra.mxu0 %v1524
        %1546 = vmatpush.msra.mxu0 %v1523
        %1547 = vmatpush.msra.mxu0 %v1522
        %1548 = vmatpush.msra.mxu0 %v1521
        %1549 = vmatpush.msra.mxu0 %v1520
        %1550 = vmatpush.msra.mxu0 %v1519
        %1551 = vmatpush.msra.mxu0 %v1518
        %1552 = vmatpush.msra.mxu0 %v1517
        %1553 = vmatmul.f32.gmra.mxu0 %v1515
        %v1554 = vpop.f32.mrf.mxu0
        %v1555 = vadd.f32 %v1535, %v1554
        %1556 = vmatmul.f32.gmra.mxu0 %v1516
        %v1557 = vpop.f32.mrf.mxu0
        %v1558 = vadd.f32 %v1535, %v1557
        %1559 = vdwg.mxu0
        %v1560 = vadd.f32 %v1404, %v1555
        %v1561 = vadd.f32 %v1405, %v1558
        %1562 = vst.msk [vmem:[#allocation2] sm:$0xff] %vm693, %v1560
        %1563 = vst.msk [vmem:[#allocation2 + $0x8] sm:$0xff] %vm693, %v1561
        %p1564 = scmp.eq.s32.totalorder %s28, 1
        // Predicated region
        $region89: #{gpt2_encoder_forward.1} parent=83 // pred_check
          %p1565 = pneg %p1564
        $region90: #{gpt2_encoder_forward.1} parent=83 // pred_check_branch
          %1567 = sbr.rel (%p1565) target = $region92
        $region91: #{gpt2_encoder_forward.1} parent=83 // pred_region
          %v1568 = vld [vmem:[%s14] sm:$0x1]
          %v1569 = vld [vmem:[%s15] sm:$0x1]
          %v1570 = vsel %vm693, %v1560, 0.0
          %1571 = vadd.xlane.f32.xlu0 %v1570
          %v1572 = vpop.xlane.xlu0 %1571
          %v1573 = vsel %vm693, %v1561, 0.0
          %1574 = vadd.xlane.f32.xlu0 %v1573
          %v1575 = vpop.xlane.xlu0 %1574
          %v1576 = vmul.f32 %v1572, %v706
          %v1577 = vmul.f32 %v1575, %v706
          %v1578 = vsub.f32 %v1560, %v1576
          %v1579 = vsub.f32 %v1561, %v1577
          %v1580 = vmul.f32 %v1578, %v1578
          %v1581 = vmul.f32 %v1579, %v1579
          %v1582 = vsel %vm693, %v1580, 0.0
          %1583 = vadd.xlane.f32.xlu0 %v1582
          %v1584 = vpop.xlane.xlu0 %1583
          %v1585 = vsel %vm693, %v1581, 0.0
          %1586 = vadd.xlane.f32.xlu0 %v1585
          %v1587 = vpop.xlane.xlu0 %1586
          %v1588 = vmul.f32 %v1584, %v706
          %v1589 = vmul.f32 %v1587, %v706
          %v1590 = vadd.f32 %v1588, 1e-05
          %v1591 = vadd.f32 %v1589, 1e-05
          %v1592 = vrsqrt.pop %v1590
          %v1593 = vmul.f32 %v1592, %v1590
          %v1594 = vmul.f32 %v1593, %v1592
          %v1595 = vmul.f32 0.5, %v1594
          %v1596 = vsub.f32 1.5, %v1595
          %v1597 = vmul.f32 %v1592, %v1596
          %vm1598 = vweird.f32 %v1590
          %vm1599 = vweird.f32 %v1592
          %vm1600 = vmor %vm1598, %vm1599
          %v1601 = vsel %vm1600, %v1592, %v1597
          %v1602 = vrsqrt.pop %v1591
          %v1603 = vmul.f32 %v1602, %v1591
          %v1604 = vmul.f32 %v1603, %v1602
          %v1605 = vmul.f32 0.5, %v1604
          %v1606 = vsub.f32 1.5, %v1605
          %v1607 = vmul.f32 %v1602, %v1606
          %vm1608 = vweird.f32 %v1591
          %vm1609 = vweird.f32 %v1602
          %vm1610 = vmor %vm1608, %vm1609
          %v1611 = vsel %vm1610, %v1602, %v1607
          %v1612 = vmul.f32 %v1578, %v1601
          %v1613 = vmul.f32 %v1579, %v1611
          %v1615 = vperm.slane %v1568, 0
          %v1617 = vmul.f32 %v1612, %v1615
          %v1618 = vmul.f32 %v1613, %v1615
          %v1620 = vperm.slane %v1569, 0
          %v1622 = vadd.f32 %v1617, %v1620
          %v1623 = vadd.f32 %v1618, %v1620
          %1624 = vst.msk [vmem:[#allocation4] sm:$0xff] %vm693, %v1622
          %1625 = vst.msk [vmem:[#allocation4 + $0x8] sm:$0xff] %vm693, %v1623
        $region92: #{gpt2_encoder_forward.1} parent=83 // pred_fallthru
          _
        // Predicated region
        $region93: #{gpt2_encoder_forward.1} parent=83 // pred_check
          %p1626 = pneg %p437
        $region94: #{gpt2_encoder_forward.1} parent=83 // pred_check_branch
          %1628 = sbr.rel (%p1626) target = $region96
        $region95: #{gpt2_encoder_forward.1} parent=83 // pred_region
          %1630 = vsyncadd [#allocation5], 0
          %s1631 = sshll.u32 [#allocation4], 4
          %s1632 = int_to_ptr.vmem [resolvable:$true] %s1631
          %s1633 = sshll.u32 %s16, 4
          %s1634 = int_to_ptr.hbm [resolvable:$true] %s1633
          %1639 = dma.vmem_to_hbm [thread:$0]  %s1632, 256, %s1634, [#allocation5], 128, 128, 8
        $region96: #{gpt2_encoder_forward.1} parent=83 // pred_fallthru
          _
        // Predicated region
        $region97: #{gpt2_encoder_forward.1} parent=83 // pred_check
          %p1640 = pneg %p437
        $region98: #{gpt2_encoder_forward.1} parent=83 // pred_check_branch
          %1642 = sbr.rel (%p1640) target = $region100
        $region99: #{gpt2_encoder_forward.1} parent=83 // pred_region
          %1644 = dma.done [#allocation5], 256
        $region100: #{gpt2_encoder_forward.1} parent=83 // pred_fallthru
          _
      $region84: #{gpt2_encoder_forward.1} parent=5 // pred_fallthru
        _
      %p1645 = scmp.le.s32.totalorder 2, %s23
      // Predicated region
      $region101: #{gpt2_encoder_forward.1} parent=5 // pred_check
        %p1646 = pneg %p1645
      $region102: #{gpt2_encoder_forward.1} parent=5 // pred_check_branch
        %1648 = sbr.rel (%p1646) target = $region104
      $region103: #{gpt2_encoder_forward.1} parent=5 // pred_region
        %s1649 = ssub.s32 %s23, 2
      $region104: #{gpt2_encoder_forward.1} parent=5 // pred_fallthru
        _
    $region6: #{gpt2_encoder_forward.1} parent=1 // loop_footer
      %s27 = sadd.s32 1, %s23
    $region7: #{gpt2_encoder_forward.1} parent=1 // loop_footer_branch
      %22 = sbr.rel target = $region3
    $region8: #{gpt2_encoder_forward.1} parent=1 // loop_exit
      _
    %1650 = vsyncpa [#allocation5], 1
    %s1651 = scalar_lea.sflag [#allocation5], 1
    %1652 = vsyncpa %s1651, 1

</llo_original>
